<compile_context>
chip_gen: v7x
topology: tpu7x:2x2x1
jax: 0.10.0
libtpu: 0.0.40
codegen_flags: <defaults>
</compile_context>

<pallas_src>
import functools

import jax
import jax.numpy as jnp
from jax import lax
from jax.experimental import pallas as pl
from jax.experimental.pallas import tpu as pltpu


def _gru_kernel(x_ref, wih_ref, whh_ref, bih_ref, bhh_ref,
                out_ref, gx_ref, *, hidden_size, gate_pad):
    """Single-layer GRU over the whole sequence, batch = 1.

    x_ref   : (T, I)       input sequence
    wih_ref : (I, 3P)      W_ih^T, gate-padded (gate order r, z, n; each gate 128-lane aligned)
    whh_ref : (P, 3P)      W_hh^T, gate-padded cols, zero-padded rows H..P-1
    bih_ref : (1, 3P)      b_ih, gate-padded
    bhh_ref : (1, 3P)      b_hh, gate-padded
    out_ref : (1, H)       final hidden state
    gx_ref  : (T, 3P)      scratch: precomputed input projections
    """
    H = hidden_size
    P = gate_pad
    T = x_ref.shape[0]

    # Hot matmul #1: project all timesteps at once on the MXU.
    gx_ref[...] = (
        jnp.dot(x_ref[...], wih_ref[...], preferred_element_type=jnp.float32)
        + bih_ref[...]
    )

    # Loop-invariant recurrent weights hoisted into vregs (P x 3P f32 is small).
    whh = whh_ref[...]          # (P, 3P)
    bhh = bhh_ref[...]          # (1, 3P)

    # Hidden state carried at padded width P; padded lanes stay exactly 0:
    #   gx/gh pad = 0  ->  r,z pad = 0.5, n pad = 0  ->  h_new pad = 0.5 * h_pad = 0.
    h0 = jnp.zeros((1, P), jnp.float32)

    def step(t, h):
        gx = gx_ref[pl.ds(t, 1), :]                                     # (1, 3P)
        # Hot matmul #2 (recurrent): h @ W_hh^T (padded rows of whh are zero).
        gh = jnp.dot(h, whh, preferred_element_type=jnp.float32) + bhh  # (1, 3P)
        # r and z in one fused sigmoid over the first two lane-aligned gate blocks.
        rz = jax.nn.sigmoid(gx[:, :2 * P] + gh[:, :2 * P])              # (1, 2P)
        r = rz[:, :P]                                                   # (1, P)
        z = rz[:, P:2 * P]                                              # (1, P)
        n = jnp.tanh(gx[:, 2 * P:] + r * gh[:, 2 * P:])                 # (1, P)
        return (1.0 - z) * n + z * h                                    # (1, P)

    h_final = lax.fori_loop(0, T, step, h0, unroll=True)
    out_ref[...] = h_final[:, :H]


def pack_gru_params(w_ih, w_hh, b_ih, b_hh, *, input_size, hidden_size):
    """One-time packing of PyTorch-layout GRU weights.

    w_ih: (3H, I), w_hh: (3H, H), b_ih/b_hh: (3H,)  (gate order r, z, n)
    Returns (wih_p, whh_p, bih_p, bhh_p, P) with each gate block zero-padded to
    P = next multiple of 128 columns (128-lane aligned gates); whh additionally
    gets zero rows H..P-1 so it can be applied to the P-wide hidden state.
    """
    H = hidden_size
    P = ((H + 127) // 128) * 128

    w_ih = jnp.asarray(w_ih, jnp.float32)
    w_hh = jnp.asarray(w_hh, jnp.float32)
    b_ih = jnp.asarray(b_ih, jnp.float32)
    b_hh = jnp.asarray(b_hh, jnp.float32)

    def pack_cols(mat_t):
        # mat_t: (rows, 3H) -> (rows, 3P), gate g placed at columns [g*P, g*P+H)
        rows = mat_t.shape[0]
        out = jnp.zeros((rows, 3 * P), jnp.float32)
        for g in range(3):
            out = out.at[:, g * P:g * P + H].set(mat_t[:, g * H:(g + 1) * H])
        return out

    wih_p = pack_cols(w_ih.T)                                   # (I, 3P)
    whh_cols = pack_cols(w_hh.T)                                # (H, 3P)
    whh_p = jnp.zeros((P, 3 * P), jnp.float32).at[:H, :].set(whh_cols)  # (P, 3P)
    bih_p = pack_cols(b_ih.reshape(1, 3 * H))                   # (1, 3P)
    bhh_p = pack_cols(b_hh.reshape(1, 3 * H))                   # (1, 3P)
    return wih_p, whh_p, bih_p, bhh_p, P


def classify_rnn_forward(x, packed_params, *, input_size, hidden_size):
    """Pallas wrapper matching ClassifyRNN.forward.

    x : arbitrary shape, numel divisible by input_size (as in x.view(-1, 1, I))
    packed_params : output of pack_gru_params (call once per parameter set)
    returns (1, hidden_size) float32
    """
    wih_p, whh_p, bih_p, bhh_p, P = packed_params
    x_seq = jnp.reshape(x, (-1, input_size)).astype(jnp.float32)   # (T, I)
    T = x_seq.shape[0]
    H = hidden_size

    vmem_spec = pl.BlockSpec(memory_space=pltpu.MemorySpace.VMEM)
    kernel = functools.partial(_gru_kernel, hidden_size=H, gate_pad=P)

    return pl.pallas_call(
        kernel,
        out_shape=jax.ShapeDtypeStruct((1, H), jnp.float32),
        in_specs=[vmem_spec] * 5,
        out_specs=vmem_spec,
        scratch_shapes=[
            pltpu.VMEM((T, 3 * P), jnp.float32),   # gx (input projections)
        ],
    )(x_seq, wih_p, whh_p, bih_p, bhh_p)


def _gru_reference(x, w_ih, w_hh, b_ih, b_hh, *, input_size, hidden_size):
    """Pure-JAX reference of the same forward pass (for correctness check)."""
    x_seq = jnp.reshape(x, (-1, input_size)).astype(jnp.float32)
    H = hidden_size

    def step(h, xt):
        gx = xt @ w_ih.T + b_ih
        gh = h @ w_hh.T + b_hh
        r = jax.nn.sigmoid(gx[0:H] + gh[0:H])
        z = jax.nn.sigmoid(gx[H:2 * H] + gh[H:2 * H])
        n = jnp.tanh(gx[2 * H:3 * H] + r * gh[2 * H:3 * H])
        h_new = (1.0 - z) * n + z * h
        return h_new, None

    h0 = jnp.zeros((H,), jnp.float32)
    h_final, _ = lax.scan(step, h0, x_seq)
    return h_final.reshape(1, H)


if __name__ == "__main__":
    input_size = 16
    hidden_size = 32

    key = jax.random.PRNGKey(0)
    kx, k1, k2, k3, k4 = jax.random.split(key, 5)

    # x of shape (2, 4, 16): forward flattens it to a sequence of T=8 steps.
    x = jax.random.normal(kx, (2, 4, input_size), dtype=jnp.float32)

    # Deterministic GRU parameters (PyTorch uniform(-1/sqrt(H), 1/sqrt(H)) style).
    bound = 1.0 / jnp.sqrt(jnp.float32(hidden_size))
    w_ih = jax.random.uniform(k1, (3 * hidden_size, input_size),
                              minval=-bound, maxval=bound, dtype=jnp.float32)
    w_hh = jax.random.uniform(k2, (3 * hidden_size, hidden_size),
                              minval=-bound, maxval=bound, dtype=jnp.float32)
    b_ih = jax.random.uniform(k3, (3 * hidden_size,),
                              minval=-bound, maxval=bound, dtype=jnp.float32)
    b_hh = jax.random.uniform(k4, (3 * hidden_size,),
                              minval=-bound, maxval=bound, dtype=jnp.float32)

    # Pack weights once (transpose + lane-aligned gate padding), reuse per call.
    packed = pack_gru_params(w_ih, w_hh, b_ih, b_hh,
                             input_size=input_size, hidden_size=hidden_size)

    out = classify_rnn_forward(x, packed,
                               input_size=input_size, hidden_size=hidden_size)
    out = jax.block_until_ready(out)

    ref = _gru_reference(x, w_ih, w_hh, b_ih, b_hh,
                         input_size=input_size, hidden_size=hidden_size)
    assert out.shape == (1, hidden_size)
    assert jnp.allclose(out, ref, atol=1e-5, rtol=1e-5), (out, ref)

    print("KERNEL_OK")
</pallas_src>

<mosaic_0001>
module attributes {stable_mosaic.version = 11 : i64} {
  func.func @_gru_kernel(%arg0: memref<8x16xf32, #tpu.memory_space<vmem>>, %arg1: memref<16x384xf32, #tpu.memory_space<vmem>>, %arg2: memref<128x384xf32, #tpu.memory_space<vmem>>, %arg3: memref<1x384xf32, #tpu.memory_space<vmem>>, %arg4: memref<1x384xf32, #tpu.memory_space<vmem>>, %arg5: memref<1x32xf32, #tpu.memory_space<vmem>>, %arg6: memref<8x384xf32, #tpu.memory_space<vmem>>) attributes {dimension_semantics = [], scalar_prefetch = 0 : i64, scratch_operands = 1 : i64, tpu.core_type = #tpu.core_type<tc>} {
    %c0 = arith.constant 0 : index
    %c0_0 = arith.constant 0 : index
    %0 = vector.load %arg0[%c0, %c0_0] : memref<8x16xf32, #tpu.memory_space<vmem>>, vector<8x16xf32>
    %c0_1 = arith.constant 0 : index
    %c0_2 = arith.constant 0 : index
    %1 = vector.load %arg1[%c0_1, %c0_2] : memref<16x384xf32, #tpu.memory_space<vmem>>, vector<16x384xf32>
    %cst = arith.constant dense<0.000000e+00> : vector<8x384xf32>
    %2 = tpu.matmul %0, %1, %cst {dimension_numbers = #tpu.dot_dimension_numbers<[1], [0], [0], [1], [0, 0, 1, 1], [], []>} : vector<8x16xf32>, vector<16x384xf32>, vector<8x384xf32> -> vector<8x384xf32>
    %c0_3 = arith.constant 0 : index
    %c0_4 = arith.constant 0 : index
    %3 = vector.load %arg3[%c0_3, %c0_4] : memref<1x384xf32, #tpu.memory_space<vmem>>, vector<1x384xf32>
    %4 = vector.broadcast %3 : vector<1x384xf32> to vector<8x384xf32>
    %5 = arith.addf %2, %4 : vector<8x384xf32>
    %c0_5 = arith.constant 0 : index
    %c0_6 = arith.constant 0 : index
    %6 = vector.load %arg6[%c0_5, %c0_6] : memref<8x384xf32, #tpu.memory_space<vmem>>, vector<8x384xf32>
    tpu.vector_store %arg6[%c0_5, %c0_6], %5 {strides = array<i32>} : memref<8x384xf32, #tpu.memory_space<vmem>>, vector<8x384xf32>,
    %c0_7 = arith.constant 0 : index
    %c0_8 = arith.constant 0 : index
    %7 = vector.load %arg2[%c0_7, %c0_8] : memref<128x384xf32, #tpu.memory_space<vmem>>, vector<128x384xf32>
    %c0_9 = arith.constant 0 : index
    %c0_10 = arith.constant 0 : index
    %8 = vector.load %arg4[%c0_9, %c0_10] : memref<1x384xf32, #tpu.memory_space<vmem>>, vector<1x384xf32>
    %cst_11 = arith.constant 0.000000e+00 : f32
    %9 = vector.broadcast %cst_11 : f32 to vector<1x128xf32>
    %c0_i32 = arith.constant 0 : i32
    %10 = arith.index_cast %c0_i32 : i32 to index
    %c0_12 = arith.constant 0 : index
    %11 = vector.load %arg6[%10, %c0_12] : memref<8x384xf32, #tpu.memory_space<vmem>>, vector<1x384xf32>
    %cst_13 = arith.constant dense<0.000000e+00> : vector<1x384xf32>
    %12 = tpu.matmul %9, %7, %cst_13 {dimension_numbers = #tpu.dot_dimension_numbers<[1], [0], [0], [1], [0, 0, 1, 1], [], []>} : vector<1x128xf32>, vector<128x384xf32>, vector<1x384xf32> -> vector<1x384xf32>
    %13 = arith.addf %12, %8 : vector<1x384xf32>
    %14 = vector.extract_strided_slice %11 {offsets = [0, 0], sizes = [1, 256], strides = [1, 1]} : vector<1x384xf32> to vector<1x256xf32>
    %15 = vector.extract_strided_slice %13 {offsets = [0, 0], sizes = [1, 256], strides = [1, 1]} : vector<1x384xf32> to vector<1x256xf32>
    %16 = arith.addf %14, %15 : vector<1x256xf32>
    %17 = arith.negf %16 : vector<1x256xf32>
    %18 = math.exp %17 : vector<1x256xf32>
    %cst_14 = arith.constant 1.000000e+00 : f32
    %19 = vector.broadcast %cst_14 : f32 to vector<1x256xf32>
    %20 = arith.addf %19, %18 : vector<1x256xf32>
    %21 = arith.divf %19, %20 : vector<1x256xf32>
    %22 = vector.extract_strided_slice %21 {offsets = [0, 0], sizes = [1, 128], strides = [1, 1]} : vector<1x256xf32> to vector<1x128xf32>
    %23 = vector.extract_strided_slice %21 {offsets = [0, 128], sizes = [1, 128], strides = [1, 1]} : vector<1x256xf32> to vector<1x128xf32>
    %24 = vector.extract_strided_slice %11 {offsets = [0, 256], sizes = [1, 128], strides = [1, 1]} : vector<1x384xf32> to vector<1x128xf32>
    %25 = vector.extract_strided_slice %13 {offsets = [0, 256], sizes = [1, 128], strides = [1, 1]} : vector<1x384xf32> to vector<1x128xf32>
    %26 = arith.mulf %22, %25 : vector<1x128xf32>
    %27 = arith.addf %24, %26 : vector<1x128xf32>
    %28 = math.tanh %27 : vector<1x128xf32>
    %cst_15 = arith.constant 1.000000e+00 : f32
    %29 = vector.broadcast %cst_15 : f32 to vector<1x128xf32>
    %30 = arith.subf %29, %23 : vector<1x128xf32>
    %31 = arith.mulf %30, %28 : vector<1x128xf32>
    %32 = arith.mulf %23, %9 : vector<1x128xf32>
    %33 = arith.addf %31, %32 : vector<1x128xf32>
    %c1_i32 = arith.constant 1 : i32
    %34 = arith.index_cast %c1_i32 : i32 to index
    %c0_16 = arith.constant 0 : index
    %35 = vector.load %arg6[%34, %c0_16] : memref<8x384xf32, #tpu.memory_space<vmem>>, vector<1x384xf32>
    %cst_17 = arith.constant dense<0.000000e+00> : vector<1x384xf32>
    %36 = tpu.matmul %33, %7, %cst_17 {dimension_numbers = #tpu.dot_dimension_numbers<[1], [0], [0], [1], [0, 0, 1, 1], [], []>} : vector<1x128xf32>, vector<128x384xf32>, vector<1x384xf32> -> vector<1x384xf32>
    %37 = arith.addf %36, %8 : vector<1x384xf32>
    %38 = vector.extract_strided_slice %35 {offsets = [0, 0], sizes = [1, 256], strides = [1, 1]} : vector<1x384xf32> to vector<1x256xf32>
    %39 = vector.extract_strided_slice %37 {offsets = [0, 0], sizes = [1, 256], strides = [1, 1]} : vector<1x384xf32> to vector<1x256xf32>
    %40 = arith.addf %38, %39 : vector<1x256xf32>
    %41 = arith.negf %40 : vector<1x256xf32>
    %42 = math.exp %41 : vector<1x256xf32>
    %cst_18 = arith.constant 1.000000e+00 : f32
    %43 = vector.broadcast %cst_18 : f32 to vector<1x256xf32>
    %44 = arith.addf %43, %42 : vector<1x256xf32>
    %45 = arith.divf %43, %44 : vector<1x256xf32>
    %46 = vector.extract_strided_slice %45 {offsets = [0, 0], sizes = [1, 128], strides = [1, 1]} : vector<1x256xf32> to vector<1x128xf32>
    %47 = vector.extract_strided_slice %45 {offsets = [0, 128], sizes = [1, 128], strides = [1, 1]} : vector<1x256xf32> to vector<1x128xf32>
    %48 = vector.extract_strided_slice %35 {offsets = [0, 256], sizes = [1, 128], strides = [1, 1]} : vector<1x384xf32> to vector<1x128xf32>
    %49 = vector.extract_strided_slice %37 {offsets = [0, 256], sizes = [1, 128], strides = [1, 1]} : vector<1x384xf32> to vector<1x128xf32>
    %50 = arith.mulf %46, %49 : vector<1x128xf32>
    %51 = arith.addf %48, %50 : vector<1x128xf32>
    %52 = math.tanh %51 : vector<1x128xf32>
    %cst_19 = arith.constant 1.000000e+00 : f32
    %53 = vector.broadcast %cst_19 : f32 to vector<1x128xf32>
    %54 = arith.subf %53, %47 : vector<1x128xf32>
    %55 = arith.mulf %54, %52 : vector<1x128xf32>
    %56 = arith.mulf %47, %33 : vector<1x128xf32>
    %57 = arith.addf %55, %56 : vector<1x128xf32>
    %c2_i32 = arith.constant 2 : i32
    %58 = arith.index_cast %c2_i32 : i32 to index
    %c0_20 = arith.constant 0 : index
    %59 = vector.load %arg6[%58, %c0_20] : memref<8x384xf32, #tpu.memory_space<vmem>>, vector<1x384xf32>
    %cst_21 = arith.constant dense<0.000000e+00> : vector<1x384xf32>
    %60 = tpu.matmul %57, %7, %cst_21 {dimension_numbers = #tpu.dot_dimension_numbers<[1], [0], [0], [1], [0, 0, 1, 1], [], []>} : vector<1x128xf32>, vector<128x384xf32>, vector<1x384xf32> -> vector<1x384xf32>
    %61 = arith.addf %60, %8 : vector<1x384xf32>
    %62 = vector.extract_strided_slice %59 {offsets = [0, 0], sizes = [1, 256], strides = [1, 1]} : vector<1x384xf32> to vector<1x256xf32>
    %63 = vector.extract_strided_slice %61 {offsets = [0, 0], sizes = [1, 256], strides = [1, 1]} : vector<1x384xf32> to vector<1x256xf32>
    %64 = arith.addf %62, %63 : vector<1x256xf32>
    %65 = arith.negf %64 : vector<1x256xf32>
    %66 = math.exp %65 : vector<1x256xf32>
    %cst_22 = arith.constant 1.000000e+00 : f32
    %67 = vector.broadcast %cst_22 : f32 to vector<1x256xf32>
    %68 = arith.addf %67, %66 : vector<1x256xf32>
    %69 = arith.divf %67, %68 : vector<1x256xf32>
    %70 = vector.extract_strided_slice %69 {offsets = [0, 0], sizes = [1, 128], strides = [1, 1]} : vector<1x256xf32> to vector<1x128xf32>
    %71 = vector.extract_strided_slice %69 {offsets = [0, 128], sizes = [1, 128], strides = [1, 1]} : vector<1x256xf32> to vector<1x128xf32>
    %72 = vector.extract_strided_slice %59 {offsets = [0, 256], sizes = [1, 128], strides = [1, 1]} : vector<1x384xf32> to vector<1x128xf32>
    %73 = vector.extract_strided_slice %61 {offsets = [0, 256], sizes = [1, 128], strides = [1, 1]} : vector<1x384xf32> to vector<1x128xf32>
    %74 = arith.mulf %70, %73 : vector<1x128xf32>
    %75 = arith.addf %72, %74 : vector<1x128xf32>
    %76 = math.tanh %75 : vector<1x128xf32>
    %cst_23 = arith.constant 1.000000e+00 : f32
    %77 = vector.broadcast %cst_23 : f32 to vector<1x128xf32>
    %78 = arith.subf %77, %71 : vector<1x128xf32>
    %79 = arith.mulf %78, %76 : vector<1x128xf32>
    %80 = arith.mulf %71, %57 : vector<1x128xf32>
    %81 = arith.addf %79, %80 : vector<1x128xf32>
    %c3_i32 = arith.constant 3 : i32
    %82 = arith.index_cast %c3_i32 : i32 to index
    %c0_24 = arith.constant 0 : index
    %83 = vector.load %arg6[%82, %c0_24] : memref<8x384xf32, #tpu.memory_space<vmem>>, vector<1x384xf32>
    %cst_25 = arith.constant dense<0.000000e+00> : vector<1x384xf32>
    %84 = tpu.matmul %81, %7, %cst_25 {dimension_numbers = #tpu.dot_dimension_numbers<[1], [0], [0], [1], [0, 0, 1, 1], [], []>} : vector<1x128xf32>, vector<128x384xf32>, vector<1x384xf32> -> vector<1x384xf32>
    %85 = arith.addf %84, %8 : vector<1x384xf32>
    %86 = vector.extract_strided_slice %83 {offsets = [0, 0], sizes = [1, 256], strides = [1, 1]} : vector<1x384xf32> to vector<1x256xf32>
    %87 = vector.extract_strided_slice %85 {offsets = [0, 0], sizes = [1, 256], strides = [1, 1]} : vector<1x384xf32> to vector<1x256xf32>
    %88 = arith.addf %86, %87 : vector<1x256xf32>
    %89 = arith.negf %88 : vector<1x256xf32>
    %90 = math.exp %89 : vector<1x256xf32>
    %cst_26 = arith.constant 1.000000e+00 : f32
    %91 = vector.broadcast %cst_26 : f32 to vector<1x256xf32>
    %92 = arith.addf %91, %90 : vector<1x256xf32>
    %93 = arith.divf %91, %92 : vector<1x256xf32>
    %94 = vector.extract_strided_slice %93 {offsets = [0, 0], sizes = [1, 128], strides = [1, 1]} : vector<1x256xf32> to vector<1x128xf32>
    %95 = vector.extract_strided_slice %93 {offsets = [0, 128], sizes = [1, 128], strides = [1, 1]} : vector<1x256xf32> to vector<1x128xf32>
    %96 = vector.extract_strided_slice %83 {offsets = [0, 256], sizes = [1, 128], strides = [1, 1]} : vector<1x384xf32> to vector<1x128xf32>
    %97 = vector.extract_strided_slice %85 {offsets = [0, 256], sizes = [1, 128], strides = [1, 1]} : vector<1x384xf32> to vector<1x128xf32>
    %98 = arith.mulf %94, %97 : vector<1x128xf32>
    %99 = arith.addf %96, %98 : vector<1x128xf32>
    %100 = math.tanh %99 : vector<1x128xf32>
    %cst_27 = arith.constant 1.000000e+00 : f32
    %101 = vector.broadcast %cst_27 : f32 to vector<1x128xf32>
    %102 = arith.subf %101, %95 : vector<1x128xf32>
    %103 = arith.mulf %102, %100 : vector<1x128xf32>
    %104 = arith.mulf %95, %81 : vector<1x128xf32>
    %105 = arith.addf %103, %104 : vector<1x128xf32>
    %c4_i32 = arith.constant 4 : i32
    %106 = arith.index_cast %c4_i32 : i32 to index
    %c0_28 = arith.constant 0 : index
    %107 = vector.load %arg6[%106, %c0_28] : memref<8x384xf32, #tpu.memory_space<vmem>>, vector<1x384xf32>
    %cst_29 = arith.constant dense<0.000000e+00> : vector<1x384xf32>
    %108 = tpu.matmul %105, %7, %cst_29 {dimension_numbers = #tpu.dot_dimension_numbers<[1], [0], [0], [1], [0, 0, 1, 1], [], []>} : vector<1x128xf32>, vector<128x384xf32>, vector<1x384xf32> -> vector<1x384xf32>
    %109 = arith.addf %108, %8 : vector<1x384xf32>
    %110 = vector.extract_strided_slice %107 {offsets = [0, 0], sizes = [1, 256], strides = [1, 1]} : vector<1x384xf32> to vector<1x256xf32>
    %111 = vector.extract_strided_slice %109 {offsets = [0, 0], sizes = [1, 256], strides = [1, 1]} : vector<1x384xf32> to vector<1x256xf32>
    %112 = arith.addf %110, %111 : vector<1x256xf32>
    %113 = arith.negf %112 : vector<1x256xf32>
    %114 = math.exp %113 : vector<1x256xf32>
    %cst_30 = arith.constant 1.000000e+00 : f32
    %115 = vector.broadcast %cst_30 : f32 to vector<1x256xf32>
    %116 = arith.addf %115, %114 : vector<1x256xf32>
    %117 = arith.divf %115, %116 : vector<1x256xf32>
    %118 = vector.extract_strided_slice %117 {offsets = [0, 0], sizes = [1, 128], strides = [1, 1]} : vector<1x256xf32> to vector<1x128xf32>
    %119 = vector.extract_strided_slice %117 {offsets = [0, 128], sizes = [1, 128], strides = [1, 1]} : vector<1x256xf32> to vector<1x128xf32>
    %120 = vector.extract_strided_slice %107 {offsets = [0, 256], sizes = [1, 128], strides = [1, 1]} : vector<1x384xf32> to vector<1x128xf32>
    %121 = vector.extract_strided_slice %109 {offsets = [0, 256], sizes = [1, 128], strides = [1, 1]} : vector<1x384xf32> to vector<1x128xf32>
    %122 = arith.mulf %118, %121 : vector<1x128xf32>
    %123 = arith.addf %120, %122 : vector<1x128xf32>
    %124 = math.tanh %123 : vector<1x128xf32>
    %cst_31 = arith.constant 1.000000e+00 : f32
    %125 = vector.broadcast %cst_31 : f32 to vector<1x128xf32>
    %126 = arith.subf %125, %119 : vector<1x128xf32>
    %127 = arith.mulf %126, %124 : vector<1x128xf32>
    %128 = arith.mulf %119, %105 : vector<1x128xf32>
    %129 = arith.addf %127, %128 : vector<1x128xf32>
    %c5_i32 = arith.constant 5 : i32
    %130 = arith.index_cast %c5_i32 : i32 to index
    %c0_32 = arith.constant 0 : index
    %131 = vector.load %arg6[%130, %c0_32] : memref<8x384xf32, #tpu.memory_space<vmem>>, vector<1x384xf32>
    %cst_33 = arith.constant dense<0.000000e+00> : vector<1x384xf32>
    %132 = tpu.matmul %129, %7, %cst_33 {dimension_numbers = #tpu.dot_dimension_numbers<[1], [0], [0], [1], [0, 0, 1, 1], [], []>} : vector<1x128xf32>, vector<128x384xf32>, vector<1x384xf32> -> vector<1x384xf32>
    %133 = arith.addf %132, %8 : vector<1x384xf32>
    %134 = vector.extract_strided_slice %131 {offsets = [0, 0], sizes = [1, 256], strides = [1, 1]} : vector<1x384xf32> to vector<1x256xf32>
    %135 = vector.extract_strided_slice %133 {offsets = [0, 0], sizes = [1, 256], strides = [1, 1]} : vector<1x384xf32> to vector<1x256xf32>
    %136 = arith.addf %134, %135 : vector<1x256xf32>
    %137 = arith.negf %136 : vector<1x256xf32>
    %138 = math.exp %137 : vector<1x256xf32>
    %cst_34 = arith.constant 1.000000e+00 : f32
    %139 = vector.broadcast %cst_34 : f32 to vector<1x256xf32>
    %140 = arith.addf %139, %138 : vector<1x256xf32>
    %141 = arith.divf %139, %140 : vector<1x256xf32>
    %142 = vector.extract_strided_slice %141 {offsets = [0, 0], sizes = [1, 128], strides = [1, 1]} : vector<1x256xf32> to vector<1x128xf32>
    %143 = vector.extract_strided_slice %141 {offsets = [0, 128], sizes = [1, 128], strides = [1, 1]} : vector<1x256xf32> to vector<1x128xf32>
    %144 = vector.extract_strided_slice %131 {offsets = [0, 256], sizes = [1, 128], strides = [1, 1]} : vector<1x384xf32> to vector<1x128xf32>
    %145 = vector.extract_strided_slice %133 {offsets = [0, 256], sizes = [1, 128], strides = [1, 1]} : vector<1x384xf32> to vector<1x128xf32>
    %146 = arith.mulf %142, %145 : vector<1x128xf32>
    %147 = arith.addf %144, %146 : vector<1x128xf32>
    %148 = math.tanh %147 : vector<1x128xf32>
    %cst_35 = arith.constant 1.000000e+00 : f32
    %149 = vector.broadcast %cst_35 : f32 to vector<1x128xf32>
    %150 = arith.subf %149, %143 : vector<1x128xf32>
    %151 = arith.mulf %150, %148 : vector<1x128xf32>
    %152 = arith.mulf %143, %129 : vector<1x128xf32>
    %153 = arith.addf %151, %152 : vector<1x128xf32>
    %c6_i32 = arith.constant 6 : i32
    %154 = arith.index_cast %c6_i32 : i32 to index
    %c0_36 = arith.constant 0 : index
    %155 = vector.load %arg6[%154, %c0_36] : memref<8x384xf32, #tpu.memory_space<vmem>>, vector<1x384xf32>
    %cst_37 = arith.constant dense<0.000000e+00> : vector<1x384xf32>
    %156 = tpu.matmul %153, %7, %cst_37 {dimension_numbers = #tpu.dot_dimension_numbers<[1], [0], [0], [1], [0, 0, 1, 1], [], []>} : vector<1x128xf32>, vector<128x384xf32>, vector<1x384xf32> -> vector<1x384xf32>
    %157 = arith.addf %156, %8 : vector<1x384xf32>
    %158 = vector.extract_strided_slice %155 {offsets = [0, 0], sizes = [1, 256], strides = [1, 1]} : vector<1x384xf32> to vector<1x256xf32>
    %159 = vector.extract_strided_slice %157 {offsets = [0, 0], sizes = [1, 256], strides = [1, 1]} : vector<1x384xf32> to vector<1x256xf32>
    %160 = arith.addf %158, %159 : vector<1x256xf32>
    %161 = arith.negf %160 : vector<1x256xf32>
    %162 = math.exp %161 : vector<1x256xf32>
    %cst_38 = arith.constant 1.000000e+00 : f32
    %163 = vector.broadcast %cst_38 : f32 to vector<1x256xf32>
    %164 = arith.addf %163, %162 : vector<1x256xf32>
    %165 = arith.divf %163, %164 : vector<1x256xf32>
    %166 = vector.extract_strided_slice %165 {offsets = [0, 0], sizes = [1, 128], strides = [1, 1]} : vector<1x256xf32> to vector<1x128xf32>
    %167 = vector.extract_strided_slice %165 {offsets = [0, 128], sizes = [1, 128], strides = [1, 1]} : vector<1x256xf32> to vector<1x128xf32>
    %168 = vector.extract_strided_slice %155 {offsets = [0, 256], sizes = [1, 128], strides = [1, 1]} : vector<1x384xf32> to vector<1x128xf32>
    %169 = vector.extract_strided_slice %157 {offsets = [0, 256], sizes = [1, 128], strides = [1, 1]} : vector<1x384xf32> to vector<1x128xf32>
    %170 = arith.mulf %166, %169 : vector<1x128xf32>
    %171 = arith.addf %168, %170 : vector<1x128xf32>
    %172 = math.tanh %171 : vector<1x128xf32>
    %cst_39 = arith.constant 1.000000e+00 : f32
    %173 = vector.broadcast %cst_39 : f32 to vector<1x128xf32>
    %174 = arith.subf %173, %167 : vector<1x128xf32>
    %175 = arith.mulf %174, %172 : vector<1x128xf32>
    %176 = arith.mulf %167, %153 : vector<1x128xf32>
    %177 = arith.addf %175, %176 : vector<1x128xf32>
    %c7_i32 = arith.constant 7 : i32
    %178 = arith.index_cast %c7_i32 : i32 to index
    %c0_40 = arith.constant 0 : index
    %179 = vector.load %arg6[%178, %c0_40] : memref<8x384xf32, #tpu.memory_space<vmem>>, vector<1x384xf32>
    %cst_41 = arith.constant dense<0.000000e+00> : vector<1x384xf32>
    %180 = tpu.matmul %177, %7, %cst_41 {dimension_numbers = #tpu.dot_dimension_numbers<[1], [0], [0], [1], [0, 0, 1, 1], [], []>} : vector<1x128xf32>, vector<128x384xf32>, vector<1x384xf32> -> vector<1x384xf32>
    %181 = arith.addf %180, %8 : vector<1x384xf32>
    %182 = vector.extract_strided_slice %179 {offsets = [0, 0], sizes = [1, 256], strides = [1, 1]} : vector<1x384xf32> to vector<1x256xf32>
    %183 = vector.extract_strided_slice %181 {offsets = [0, 0], sizes = [1, 256], strides = [1, 1]} : vector<1x384xf32> to vector<1x256xf32>
    %184 = arith.addf %182, %183 : vector<1x256xf32>
    %185 = arith.negf %184 : vector<1x256xf32>
    %186 = math.exp %185 : vector<1x256xf32>
    %cst_42 = arith.constant 1.000000e+00 : f32
    %187 = vector.broadcast %cst_42 : f32 to vector<1x256xf32>
    %188 = arith.addf %187, %186 : vector<1x256xf32>
    %189 = arith.divf %187, %188 : vector<1x256xf32>
    %190 = vector.extract_strided_slice %189 {offsets = [0, 0], sizes = [1, 128], strides = [1, 1]} : vector<1x256xf32> to vector<1x128xf32>
    %191 = vector.extract_strided_slice %189 {offsets = [0, 128], sizes = [1, 128], strides = [1, 1]} : vector<1x256xf32> to vector<1x128xf32>
    %192 = vector.extract_strided_slice %179 {offsets = [0, 256], sizes = [1, 128], strides = [1, 1]} : vector<1x384xf32> to vector<1x128xf32>
    %193 = vector.extract_strided_slice %181 {offsets = [0, 256], sizes = [1, 128], strides = [1, 1]} : vector<1x384xf32> to vector<1x128xf32>
    %194 = arith.mulf %190, %193 : vector<1x128xf32>
    %195 = arith.addf %192, %194 : vector<1x128xf32>
    %196 = math.tanh %195 : vector<1x128xf32>
    %cst_43 = arith.constant 1.000000e+00 : f32
    %197 = vector.broadcast %cst_43 : f32 to vector<1x128xf32>
    %198 = arith.subf %197, %191 : vector<1x128xf32>
    %199 = arith.mulf %198, %196 : vector<1x128xf32>
    %200 = arith.mulf %191, %177 : vector<1x128xf32>
    %201 = arith.addf %199, %200 : vector<1x128xf32>
    %c8_i32 = arith.constant 8 : i32
    %202 = vector.extract_strided_slice %201 {offsets = [0, 0], sizes = [1, 32], strides = [1, 1]} : vector<1x128xf32> to vector<1x32xf32>
    %c0_44 = arith.constant 0 : index
    %c0_45 = arith.constant 0 : index
    %203 = vector.load %arg5[%c0_44, %c0_45] : memref<1x32xf32, #tpu.memory_space<vmem>>, vector<1x32xf32>
    tpu.vector_store %arg5[%c0_44, %c0_45], %202 {strides = array<i32>} : memref<1x32xf32, #tpu.memory_space<vmem>>, vector<1x32xf32>,
    return
  }
}

</mosaic_0001>

<llo_original>
// kernel: tpu_custom_call.1
$region0: #{tpu_custom_call.1}
  #allocation0 [shape = 'u32[]', space=smem, size = 0x4, offset = 0x4, fixed_abs, tag = 'smem constant byte address 0x4 - core index']
  #allocation1 [shape = 'u32[144,128]{1,0:T(1,128)}', space=vmem, size = 0x12000, scoped, tag = 'internal scratch']
  #allocation2 [shape = 'f32[8,384]{1,0:T(8,128)}', space=vmem, size = 0x3000, scoped, tag = 'scratch operand']
  %s0 = inlined_call_operand.hbm [shape: f32[8,16], index: 0, kind: input, shape index: {}]
  %s1 = inlined_call_operand.hbm [shape: f32[16,384], index: 1, kind: input, shape index: {}]
  %s2 = inlined_call_operand.hbm [shape: f32[128,384], index: 2, kind: input, shape index: {}]
  %s3 = inlined_call_operand.vmem [shape: f32[1,384], index: 3, kind: input, shape index: {}]
  %s4 = inlined_call_operand.vmem [shape: f32[1,384], index: 4, kind: input, shape index: {}]
  %s5 = inlined_call_operand.hbm [shape: f32[1,32], index: 5, kind: output, shape index: {}]
  %s6 = sld [smem:[#allocation0]]
  $region42: #{tpu_custom_call.1} parent=0
    _
  %s8 = ssub.s32 1, %s6
  %s9 = scalar_select 0, %s8, %s6
  $region1: #{tpu_custom_call.1} parent=0
    #allocation3 [shape = 'u8[4096]{0}', space=vmem, size = 0x1000, scoped, tag = 'input window, operand 0, single buffered']
    #allocation4 [shape = 's32[1]{0}', space=sflag, size = 0x4, scoped, tag = 'scoped memory for tpu_custom_call.1']
    #allocation5 [shape = 's32[1]{0}', space=sflag, size = 0x4, scoped, tag = 'scoped memory for tpu_custom_call.1']
    #allocation6 [shape = 'u8[24576]{0}', space=vmem, size = 0x6000, scoped, tag = 'input window, operand 1, single buffered']
    #allocation7 [shape = 's32[1]{0}', space=sflag, size = 0x4, scoped, tag = 'scoped memory for tpu_custom_call.1']
    #allocation8 [shape = 'u8[196608]{0}', space=vmem, size = 0x30000, scoped, tag = 'input window, operand 2, single buffered']
    #allocation9 [shape = 'u8[512]{0}', space=vmem, size = 0x400, scoped, tag = 'output window, operand 0, single buffered']
    %10 = vsyncpa [#allocation4], 0
    %11 = vsyncpa [#allocation7], 0
    %12 = vsyncpa [#allocation5], 0
    // Predicated region
    $region2: #{tpu_custom_call.1} parent=1 // pred_check
      _
    $region3: #{tpu_custom_call.1} parent=1 // pred_check_branch
      %14 = sbr.rel (0) target = $region5
    $region4: #{tpu_custom_call.1} parent=1 // pred_region
      %s16 = ssub.s32 128, 128
      %17 = vsyncadd [#allocation4], %s16
      %s19 = sshll.u32 [#allocation3], 4
      %s20 = int_to_ptr.vmem [resolvable:$true] %s19
      %22 = dma.hbm_to_vmem [thread:$0]  %s0, 128, %s20, [#allocation4]
    $region5: #{tpu_custom_call.1} parent=1 // pred_fallthru
      _
    // Predicated region
    $region6: #{tpu_custom_call.1} parent=1 // pred_check
      _
    $region7: #{tpu_custom_call.1} parent=1 // pred_check_branch
      %24 = sbr.rel (0) target = $region9
    $region8: #{tpu_custom_call.1} parent=1 // pred_region
      %s26 = ssub.s32 768, 768
      %27 = vsyncadd [#allocation7], %s26
      %s28 = sshll.u32 [#allocation6], 4
      %s29 = int_to_ptr.vmem [resolvable:$true] %s28
      %34 = dma.hbm_to_vmem [thread:$0]  %s1, 768, %s29, [#allocation7], 384, 384, 24
    $region9: #{tpu_custom_call.1} parent=1 // pred_fallthru
      _
    // Predicated region
    $region10: #{tpu_custom_call.1} parent=1 // pred_check
      _
    $region11: #{tpu_custom_call.1} parent=1 // pred_check_branch
      %36 = sbr.rel (0) target = $region13
    $region12: #{tpu_custom_call.1} parent=1 // pred_region
      %s38 = ssub.s32 6144, 6144
      %39 = vsyncadd [#allocation7], %s38
      %s40 = sshll.u32 [#allocation8], 4
      %s41 = int_to_ptr.vmem [resolvable:$true] %s40
      %46 = dma.hbm_to_vmem [thread:$0]  %s2, 6144, %s41, [#allocation7], 384, 384, 24
    $region13: #{tpu_custom_call.1} parent=1 // pred_fallthru
      _
    // Predicated region
    $region14: #{tpu_custom_call.1} parent=1 // pred_check
      _
    $region15: #{tpu_custom_call.1} parent=1 // pred_check_branch
      %48 = sbr.rel (0) target = $region17
    $region16: #{tpu_custom_call.1} parent=1 // pred_region
      _
    $region17: #{tpu_custom_call.1} parent=1 // pred_fallthru
      _
    // Predicated region
    $region18: #{tpu_custom_call.1} parent=1 // pred_check
      _
    $region19: #{tpu_custom_call.1} parent=1 // pred_check_branch
      %50 = sbr.rel (0) target = $region21
    $region20: #{tpu_custom_call.1} parent=1 // pred_region
      _
    $region21: #{tpu_custom_call.1} parent=1 // pred_fallthru
      _
    // Predicated region
    $region22: #{tpu_custom_call.1} parent=1 // pred_check
      _
    $region23: #{tpu_custom_call.1} parent=1 // pred_check_branch
      %52 = sbr.rel (0) target = $region25
    $region24: #{tpu_custom_call.1} parent=1 // pred_region
      %53 = dma.done [#allocation4], 128
    $region25: #{tpu_custom_call.1} parent=1 // pred_fallthru
      _
    // Predicated region
    $region26: #{tpu_custom_call.1} parent=1 // pred_check
      _
    $region27: #{tpu_custom_call.1} parent=1 // pred_check_branch
      %55 = sbr.rel (0) target = $region29
    $region28: #{tpu_custom_call.1} parent=1 // pred_region
      %56 = dma.done [#allocation7], 768
    $region29: #{tpu_custom_call.1} parent=1 // pred_fallthru
      _
    // Predicated region
    $region30: #{tpu_custom_call.1} parent=1 // pred_check
      _
    $region31: #{tpu_custom_call.1} parent=1 // pred_check_branch
      %58 = sbr.rel (0) target = $region33
    $region32: #{tpu_custom_call.1} parent=1 // pred_region
      %59 = dma.done [#allocation7], 6144
    $region33: #{tpu_custom_call.1} parent=1 // pred_fallthru
      _
    %v60 = vld [vmem:[#allocation3] sm:$0xff]
    %v61 = vld [vmem:[#allocation6] sm:$0xff]
    %v62 = vld [vmem:[#allocation6 + $0x8] sm:$0xff]
    %v63 = vld [vmem:[#allocation6 + $0x10] sm:$0xff]
    %v64 = vld [vmem:[#allocation6 + $0x18] sm:$0xff]
    %v65 = vld [vmem:[#allocation6 + $0x20] sm:$0xff]
    %v66 = vld [vmem:[#allocation6 + $0x28] sm:$0xff]
    %v67 = vld [vmem:[%s3] sm:$0x7]
    %v69 = vlaneseq
    %v70 = vshrl.u32 %v69, 7
    %v71 = vsub.s32 0, %v70
    %v72 = vrot.slane %v67, %v71
    %v73 = vlaneseq
    %v74 = vshrl.u32 %v73, 7
    %v75 = vsub.s32 1, %v74
    %v76 = vrot.slane %v67, %v75
    %v77 = vlaneseq
    %v78 = vshrl.u32 %v77, 7
    %v79 = vsub.s32 2, %v78
    %v80 = vrot.slane %v67, %v79
    %vm84 = vcmask 130048
    %v86 = vsel %vm84, %v60, 0
    %88 = vmatprep.subr.mxu0 %v62
    %89 = vmatpush1.msra.mxu0 %v61
    %90 = vmatprep.subr.mxu0 %v65
    %91 = vmatpush1.msra.mxu0 %v64
    %92 = vmatprep.subr.mxu0 0.0
    %93 = vmatpush1.msra.mxu0 0.0
    %94 = vmatprep.subr.mxu0 0.0
    %95 = vmatpush1.msra.mxu0 0.0
    %96 = vmatprep.subr.mxu0 0.0
    %97 = vmatpush1.msra.mxu0 0.0
    %98 = vmatprep.subr.mxu0 0.0
    %99 = vmatpush1.msra.mxu0 0.0
    %100 = vmatprep.subr.mxu0 0.0
    %101 = vmatpush1.msra.mxu0 0.0
    %102 = vmatprep.subr.mxu0 0.0
    %103 = vmatpush1.msra.mxu0 0.0
    %104 = vmatprep.subr.mxu0 0.0
    %105 = vmatpush1.msra.mxu0 0.0
    %106 = vmatprep.subr.mxu0 0.0
    %107 = vmatpush1.msra.mxu0 0.0
    %108 = vmatprep.subr.mxu0 0.0
    %109 = vmatpush1.msra.mxu0 0.0
    %110 = vmatprep.subr.mxu0 0.0
    %111 = vmatpush1.msra.mxu0 0.0
    %112 = vmatprep.subr.mxu0 0.0
    %113 = vmatpush1.msra.mxu0 0.0
    %114 = vmatprep.subr.mxu0 0.0
    %115 = vmatpush1.msra.mxu0 0.0
    %116 = vmatprep.subr.mxu0 0.0
    %117 = vmatpush1.msra.mxu0 0.0
    %118 = vmatprep.subr.mxu0 0.0
    %119 = vmatpush1.msra.mxu0 0.0
    %120 = vmatprep.subr.mxu0 0.0
    %121 = vmatpush1.msra.mxu0 0.0
    %122 = vmatprep.subr.mxu0 0.0
    %123 = vmatpush1.msra.mxu0 0.0
    %124 = vmatprep.subr.mxu0 0.0
    %125 = vmatpush1.msra.mxu0 0.0
    %126 = vmatprep.subr.mxu0 0.0
    %127 = vmatpush1.msra.mxu0 0.0
    %128 = vmatprep.subr.mxu0 0.0
    %129 = vmatpush1.msra.mxu0 0.0
    %130 = vmatprep.subr.mxu0 0.0
    %131 = vmatpush1.msra.mxu0 0.0
    %132 = vmatprep.subr.mxu0 0.0
    %133 = vmatpush1.msra.mxu0 0.0
    %134 = vmatprep.subr.mxu0 0.0
    %135 = vmatpush1.msra.mxu0 0.0
    %136 = vmatprep.subr.mxu0 0.0
    %137 = vmatpush1.msra.mxu0 0.0
    %138 = vmatprep.subr.mxu0 0.0
    %139 = vmatpush1.msra.mxu0 0.0
    %140 = vmatprep.subr.mxu0 0.0
    %141 = vmatpush1.msra.mxu0 0.0
    %142 = vmatprep.subr.mxu0 0.0
    %143 = vmatpush1.msra.mxu0 0.0
    %144 = vmatprep.subr.mxu0 0.0
    %145 = vmatpush1.msra.mxu0 0.0
    %146 = vmatprep.subr.mxu0 0.0
    %147 = vmatpush1.msra.mxu0 0.0
    %148 = vmatprep.subr.mxu0 0.0
    %149 = vmatpush1.msra.mxu0 0.0
    %150 = vmatprep.subr.mxu0 0.0
    %151 = vmatpush1.msra.mxu0 0.0
    %152 = vmatprep.mubr.f32.mxu0 0.0
    %153 = vmatmul.mubr.f32.gmra.mrb[0].mxu0 %v86
    %v154 = vpop.f32.mrb[0].mxu0
    %v155 = vadd.f32 %v72, %v154
    %v156 = vpop.f32.mrb[0].mxu0
    %v157 = vadd.f32 %v76, %v156
    %158 = vdwg.mxu0
    %159 = vmatprep.subr.mxu0 0.0
    %160 = vmatpush1.msra.mxu0 %v63
    %161 = vmatprep.subr.mxu0 0.0
    %162 = vmatpush1.msra.mxu0 %v66
    %163 = vmatprep.subr.mxu0 0.0
    %164 = vmatpush1.msra.mxu0 0.0
    %165 = vmatprep.subr.mxu0 0.0
    %166 = vmatpush1.msra.mxu0 0.0
    %167 = vmatprep.subr.mxu0 0.0
    %168 = vmatpush1.msra.mxu0 0.0
    %169 = vmatprep.subr.mxu0 0.0
    %170 = vmatpush1.msra.mxu0 0.0
    %171 = vmatprep.subr.mxu0 0.0
    %172 = vmatpush1.msra.mxu0 0.0
    %173 = vmatprep.subr.mxu0 0.0
    %174 = vmatpush1.msra.mxu0 0.0
    %175 = vmatprep.subr.mxu0 0.0
    %176 = vmatpush1.msra.mxu0 0.0
    %177 = vmatprep.subr.mxu0 0.0
    %178 = vmatpush1.msra.mxu0 0.0
    %179 = vmatprep.subr.mxu0 0.0
    %180 = vmatpush1.msra.mxu0 0.0
    %181 = vmatprep.subr.mxu0 0.0
    %182 = vmatpush1.msra.mxu0 0.0
    %183 = vmatprep.subr.mxu0 0.0
    %184 = vmatpush1.msra.mxu0 0.0
    %185 = vmatprep.subr.mxu0 0.0
    %186 = vmatpush1.msra.mxu0 0.0
    %187 = vmatprep.subr.mxu0 0.0
    %188 = vmatpush1.msra.mxu0 0.0
    %189 = vmatprep.subr.mxu0 0.0
    %190 = vmatpush1.msra.mxu0 0.0
    %191 = vmatprep.subr.mxu0 0.0
    %192 = vmatpush1.msra.mxu0 0.0
    %193 = vmatprep.subr.mxu0 0.0
    %194 = vmatpush1.msra.mxu0 0.0
    %195 = vmatprep.subr.mxu0 0.0
    %196 = vmatpush1.msra.mxu0 0.0
    %197 = vmatprep.subr.mxu0 0.0
    %198 = vmatpush1.msra.mxu0 0.0
    %199 = vmatprep.subr.mxu0 0.0
    %200 = vmatpush1.msra.mxu0 0.0
    %201 = vmatprep.subr.mxu0 0.0
    %202 = vmatpush1.msra.mxu0 0.0
    %203 = vmatprep.subr.mxu0 0.0
    %204 = vmatpush1.msra.mxu0 0.0
    %205 = vmatprep.subr.mxu0 0.0
    %206 = vmatpush1.msra.mxu0 0.0
    %207 = vmatprep.subr.mxu0 0.0
    %208 = vmatpush1.msra.mxu0 0.0
    %209 = vmatprep.subr.mxu0 0.0
    %210 = vmatpush1.msra.mxu0 0.0
    %211 = vmatprep.subr.mxu0 0.0
    %212 = vmatpush1.msra.mxu0 0.0
    %213 = vmatprep.subr.mxu0 0.0
    %214 = vmatpush1.msra.mxu0 0.0
    %215 = vmatprep.subr.mxu0 0.0
    %216 = vmatpush1.msra.mxu0 0.0
    %217 = vmatprep.subr.mxu0 0.0
    %218 = vmatpush1.msra.mxu0 0.0
    %219 = vmatprep.subr.mxu0 0.0
    %220 = vmatpush1.msra.mxu0 0.0
    %221 = vmatprep.subr.mxu0 0.0
    %222 = vmatpush1.msra.mxu0 0.0
    %223 = vmatprep.mubr.f32.mxu0 0.0
    %224 = vmatmul.mubr.f32.gmra.mrb[0].mxu0 %v86
    %v225 = vpop.f32.mrb[0].mxu0
    %v226 = vadd.f32 %v80, %v225
    %v227 = vpop.f32.mrb[0].mxu0
    %228 = vdwg.mxu0
    %229 = vst [vmem:[#allocation2] sm:$0xff] %v155
    %230 = vst [vmem:[#allocation2 + $0x8] sm:$0xff] %v157
    %231 = vst [vmem:[#allocation2 + $0x10] sm:$0xff] %v226
    %v232 = vld [vmem:[#allocation8] sm:$0xff]
    %v233 = vld [vmem:[#allocation8 + $0x8] sm:$0xff]
    %v234 = vld [vmem:[#allocation8 + $0x10] sm:$0xff]
    %v235 = vld [vmem:[#allocation8 + $0x18] sm:$0xff]
    %v236 = vld [vmem:[#allocation8 + $0x20] sm:$0xff]
    %v237 = vld [vmem:[#allocation8 + $0x28] sm:$0xff]
    %v238 = vld [vmem:[#allocation8 + $0x30] sm:$0xff]
    %v239 = vld [vmem:[#allocation8 + $0x38] sm:$0xff]
    %v240 = vld [vmem:[#allocation8 + $0x40] sm:$0xff]
    %v241 = vld [vmem:[#allocation8 + $0x48] sm:$0xff]
    %v242 = vld [vmem:[#allocation8 + $0x50] sm:$0xff]
    %v243 = vld [vmem:[#allocation8 + $0x58] sm:$0xff]
    %v244 = vld [vmem:[#allocation8 + $0x60] sm:$0xff]
    %v245 = vld [vmem:[#allocation8 + $0x68] sm:$0xff]
    %v246 = vld [vmem:[#allocation8 + $0x70] sm:$0xff]
    %v247 = vld [vmem:[#allocation8 + $0x78] sm:$0xff]
    %v248 = vld [vmem:[#allocation8 + $0x80] sm:$0xff]
    %v249 = vld [vmem:[#allocation8 + $0x88] sm:$0xff]
    %v250 = vld [vmem:[#allocation8 + $0x90] sm:$0xff]
    %v251 = vld [vmem:[#allocation8 + $0x98] sm:$0xff]
    %v252 = vld [vmem:[#allocation8 + $0xa0] sm:$0xff]
    %v253 = vld [vmem:[#allocation8 + $0xa8] sm:$0xff]
    %v254 = vld [vmem:[#allocation8 + $0xb0] sm:$0xff]
    %v255 = vld [vmem:[#allocation8 + $0xb8] sm:$0xff]
    %v256 = vld [vmem:[#allocation8 + $0xc0] sm:$0xff]
    %v257 = vld [vmem:[#allocation8 + $0xc8] sm:$0xff]
    %v258 = vld [vmem:[#allocation8 + $0xd0] sm:$0xff]
    %v259 = vld [vmem:[#allocation8 + $0xd8] sm:$0xff]
    %v260 = vld [vmem:[#allocation8 + $0xe0] sm:$0xff]
    %v261 = vld [vmem:[#allocation8 + $0xe8] sm:$0xff]
    %v262 = vld [vmem:[#allocation8 + $0xf0] sm:$0xff]
    %v263 = vld [vmem:[#allocation8 + $0xf8] sm:$0xff]
    %v264 = vld [vmem:[#allocation8 + $0x100] sm:$0xff]
    %v265 = vld [vmem:[#allocation8 + $0x108] sm:$0xff]
    %v266 = vld [vmem:[#allocation8 + $0x110] sm:$0xff]
    %v267 = vld [vmem:[#allocation8 + $0x118] sm:$0xff]
    %v268 = vld [vmem:[#allocation8 + $0x120] sm:$0xff]
    %v269 = vld [vmem:[#allocation8 + $0x128] sm:$0xff]
    %v270 = vld [vmem:[#allocation8 + $0x130] sm:$0xff]
    %v271 = vld [vmem:[#allocation8 + $0x138] sm:$0xff]
    %v272 = vld [vmem:[#allocation8 + $0x140] sm:$0xff]
    %v273 = vld [vmem:[#allocation8 + $0x148] sm:$0xff]
    %v274 = vld [vmem:[#allocation8 + $0x150] sm:$0xff]
    %v275 = vld [vmem:[#allocation8 + $0x158] sm:$0xff]
    %v276 = vld [vmem:[#allocation8 + $0x160] sm:$0xff]
    %v277 = vld [vmem:[#allocation8 + $0x168] sm:$0xff]
    %v278 = vld [vmem:[#allocation8 + $0x170] sm:$0xff]
    %v279 = vld [vmem:[#allocation8 + $0x178] sm:$0xff]
    %v280 = vld [vmem:[%s4] sm:$0x7]
    %v281 = vld [vmem:[#allocation2] ss:$8 sm:$0x7]
    %v283 = vlaneseq
    %v284 = vshrl.u32 %v283, 7
    %v285 = vsub.s32 0, %v284
    %v286 = vrot.slane %v280, %v285
    %v287 = vlaneseq
    %v288 = vshrl.u32 %v287, 7
    %v289 = vsub.s32 1, %v288
    %v290 = vrot.slane %v280, %v289
    %v291 = vlaneseq
    %v292 = vshrl.u32 %v291, 7
    %v293 = vsub.s32 2, %v292
    %v294 = vrot.slane %v280, %v293
    %298 = vmatprep.subr.mxu0 %v233
    %299 = vmatpush1.msra.mxu0 %v232
    %300 = vmatprep.subr.mxu0 %v236
    %301 = vmatpush1.msra.mxu0 %v235
    %302 = vmatprep.subr.mxu0 %v239
    %303 = vmatpush1.msra.mxu0 %v238
    %304 = vmatprep.subr.mxu0 %v242
    %305 = vmatpush1.msra.mxu0 %v241
    %306 = vmatprep.subr.mxu0 %v245
    %307 = vmatpush1.msra.mxu0 %v244
    %308 = vmatprep.subr.mxu0 %v248
    %309 = vmatpush1.msra.mxu0 %v247
    %310 = vmatprep.subr.mxu0 %v251
    %311 = vmatpush1.msra.mxu0 %v250
    %312 = vmatprep.subr.mxu0 %v254
    %313 = vmatpush1.msra.mxu0 %v253
    %314 = vmatprep.subr.mxu0 %v257
    %315 = vmatpush1.msra.mxu0 %v256
    %316 = vmatprep.subr.mxu0 %v260
    %317 = vmatpush1.msra.mxu0 %v259
    %318 = vmatprep.subr.mxu0 %v263
    %319 = vmatpush1.msra.mxu0 %v262
    %320 = vmatprep.subr.mxu0 %v266
    %321 = vmatpush1.msra.mxu0 %v265
    %322 = vmatprep.subr.mxu0 %v269
    %323 = vmatpush1.msra.mxu0 %v268
    %324 = vmatprep.subr.mxu0 %v272
    %325 = vmatpush1.msra.mxu0 %v271
    %326 = vmatprep.subr.mxu0 %v275
    %327 = vmatpush1.msra.mxu0 %v274
    %328 = vmatprep.subr.mxu0 %v278
    %329 = vmatpush1.msra.mxu0 %v277
    %330 = vmatprep.subr.mxu0 0.0
    %331 = vmatpush1.msra.mxu0 0.0
    %332 = vmatprep.subr.mxu0 0.0
    %333 = vmatpush1.msra.mxu0 0.0
    %334 = vmatprep.subr.mxu0 0.0
    %335 = vmatpush1.msra.mxu0 0.0
    %336 = vmatprep.subr.mxu0 0.0
    %337 = vmatpush1.msra.mxu0 0.0
    %338 = vmatprep.subr.mxu0 0.0
    %339 = vmatpush1.msra.mxu0 0.0
    %340 = vmatprep.subr.mxu0 0.0
    %341 = vmatpush1.msra.mxu0 0.0
    %342 = vmatprep.subr.mxu0 0.0
    %343 = vmatpush1.msra.mxu0 0.0
    %344 = vmatprep.subr.mxu0 0.0
    %345 = vmatpush1.msra.mxu0 0.0
    %346 = vmatprep.subr.mxu0 0.0
    %347 = vmatpush1.msra.mxu0 0.0
    %348 = vmatprep.subr.mxu0 0.0
    %349 = vmatpush1.msra.mxu0 0.0
    %350 = vmatprep.subr.mxu0 0.0
    %351 = vmatpush1.msra.mxu0 0.0
    %352 = vmatprep.subr.mxu0 0.0
    %353 = vmatpush1.msra.mxu0 0.0
    %354 = vmatprep.subr.mxu0 0.0
    %355 = vmatpush1.msra.mxu0 0.0
    %356 = vmatprep.subr.mxu0 0.0
    %357 = vmatpush1.msra.mxu0 0.0
    %358 = vmatprep.subr.mxu0 0.0
    %359 = vmatpush1.msra.mxu0 0.0
    %360 = vmatprep.subr.mxu0 0.0
    %361 = vmatpush1.msra.mxu0 0.0
    %362 = vmatprep.mubr.f32.mxu0 0.0
    %363 = vmatmul.mubr.f32.gmra.mrb[0].mxu0 0.0
    %v364 = vpop.f32.mrb[0].mxu0
    %v365 = vadd.f32 %v286, %v364
    %v366 = vpop.f32.mrb[0].mxu0
    %v367 = vadd.f32 %v290, %v366
    %368 = vdwg.mxu0
    %369 = vmatprep.subr.mxu0 0.0
    %370 = vmatpush1.msra.mxu0 %v234
    %371 = vmatprep.subr.mxu0 0.0
    %372 = vmatpush1.msra.mxu0 %v237
    %373 = vmatprep.subr.mxu0 0.0
    %374 = vmatpush1.msra.mxu0 %v240
    %375 = vmatprep.subr.mxu0 0.0
    %376 = vmatpush1.msra.mxu0 %v243
    %377 = vmatprep.subr.mxu0 0.0
    %378 = vmatpush1.msra.mxu0 %v246
    %379 = vmatprep.subr.mxu0 0.0
    %380 = vmatpush1.msra.mxu0 %v249
    %381 = vmatprep.subr.mxu0 0.0
    %382 = vmatpush1.msra.mxu0 %v252
    %383 = vmatprep.subr.mxu0 0.0
    %384 = vmatpush1.msra.mxu0 %v255
    %385 = vmatprep.subr.mxu0 0.0
    %386 = vmatpush1.msra.mxu0 %v258
    %387 = vmatprep.subr.mxu0 0.0
    %388 = vmatpush1.msra.mxu0 %v261
    %389 = vmatprep.subr.mxu0 0.0
    %390 = vmatpush1.msra.mxu0 %v264
    %391 = vmatprep.subr.mxu0 0.0
    %392 = vmatpush1.msra.mxu0 %v267
    %393 = vmatprep.subr.mxu0 0.0
    %394 = vmatpush1.msra.mxu0 %v270
    %395 = vmatprep.subr.mxu0 0.0
    %396 = vmatpush1.msra.mxu0 %v273
    %397 = vmatprep.subr.mxu0 0.0
    %398 = vmatpush1.msra.mxu0 %v276
    %399 = vmatprep.subr.mxu0 0.0
    %400 = vmatpush1.msra.mxu0 %v279
    %401 = vmatprep.subr.mxu0 0.0
    %402 = vmatpush1.msra.mxu0 0.0
    %403 = vmatprep.subr.mxu0 0.0
    %404 = vmatpush1.msra.mxu0 0.0
    %405 = vmatprep.subr.mxu0 0.0
    %406 = vmatpush1.msra.mxu0 0.0
    %407 = vmatprep.subr.mxu0 0.0
    %408 = vmatpush1.msra.mxu0 0.0
    %409 = vmatprep.subr.mxu0 0.0
    %410 = vmatpush1.msra.mxu0 0.0
    %411 = vmatprep.subr.mxu0 0.0
    %412 = vmatpush1.msra.mxu0 0.0
    %413 = vmatprep.subr.mxu0 0.0
    %414 = vmatpush1.msra.mxu0 0.0
    %415 = vmatprep.subr.mxu0 0.0
    %416 = vmatpush1.msra.mxu0 0.0
    %417 = vmatprep.subr.mxu0 0.0
    %418 = vmatpush1.msra.mxu0 0.0
    %419 = vmatprep.subr.mxu0 0.0
    %420 = vmatpush1.msra.mxu0 0.0
    %421 = vmatprep.subr.mxu0 0.0
    %422 = vmatpush1.msra.mxu0 0.0
    %423 = vmatprep.subr.mxu0 0.0
    %424 = vmatpush1.msra.mxu0 0.0
    %425 = vmatprep.subr.mxu0 0.0
    %426 = vmatpush1.msra.mxu0 0.0
    %427 = vmatprep.subr.mxu0 0.0
    %428 = vmatpush1.msra.mxu0 0.0
    %429 = vmatprep.subr.mxu0 0.0
    %430 = vmatpush1.msra.mxu0 0.0
    %431 = vmatprep.subr.mxu0 0.0
    %432 = vmatpush1.msra.mxu0 0.0
    %433 = vmatprep.mubr.f32.mxu0 0.0
    %434 = vmatmul.mubr.f32.gmra.mrb[0].mxu0 0.0
    %v435 = vpop.f32.mrb[0].mxu0
    %v436 = vadd.f32 %v294, %v435
    %v437 = vpop.f32.mrb[0].mxu0
    %438 = vdwg.mxu0
    %v441 = vcombine.low %v365, %v367
    %v443 = vunpack.c.l.s4 1966171168
    %v444 = vunpack.c.0.s8 %v443
    %v445 = vlaneseq
    %v446 = vshrl.u32 %v445, 7
    %v447 = vsub.s32 %v444, %v446
    %v448 = vrot.slane %v441, %v447
    %v450 = vunpack.c.l.s4 1966171168
    %v451 = vunpack.c.0.s8 %v450
    %v452 = vlaneseq
    %v453 = vshrl.u32 %v452, 7
    %v454 = vsub.s32 %v451, %v453
    %v455 = vrot.slane %v448, %v454
    %v457 = vadd.f32 %v281, %v455
    %v458 = vxor.u32 %v457, 2147483648
    %v459 = vmul.f32 %v458, 1.442695
    %v460 = vpow.pop %v459
    %v461 = vadd.f32 %v460, 1.0
    %v462 = vrcp.pop %v461
    %v463 = vmul.f32 1.0, %v462
    %v464 = vmul.f32 %v463, %v436
    %v466 = vrot.slane %v281, 2
    %v468 = vadd.f32 %v466, %v464
    %v469 = vtanh.pop %v468
    %v471 = vrot.slane %v463, 1
    %v473 = vsub.f32 1.0, %v471
    %v474 = vmul.f32 %v473, %v469
    %v475 = vmul.f32 %v471, 0.0
    %v476 = vadd.f32 %v474, %v475
    %s477 = scalar_lea.vmem [#allocation2], 1
    %v478 = vld [vmem:[%s477] ss:$8 sm:$0x7]
    %479 = vmatprep.subr.mxu0 %v233
    %480 = vmatpush1.msra.mxu0 %v232
    %481 = vmatprep.subr.mxu0 %v236
    %482 = vmatpush1.msra.mxu0 %v235
    %483 = vmatprep.subr.mxu0 %v239
    %484 = vmatpush1.msra.mxu0 %v238
    %485 = vmatprep.subr.mxu0 %v242
    %486 = vmatpush1.msra.mxu0 %v241
    %487 = vmatprep.subr.mxu0 %v245
    %488 = vmatpush1.msra.mxu0 %v244
    %489 = vmatprep.subr.mxu0 %v248
    %490 = vmatpush1.msra.mxu0 %v247
    %491 = vmatprep.subr.mxu0 %v251
    %492 = vmatpush1.msra.mxu0 %v250
    %493 = vmatprep.subr.mxu0 %v254
    %494 = vmatpush1.msra.mxu0 %v253
    %495 = vmatprep.subr.mxu0 %v257
    %496 = vmatpush1.msra.mxu0 %v256
    %497 = vmatprep.subr.mxu0 %v260
    %498 = vmatpush1.msra.mxu0 %v259
    %499 = vmatprep.subr.mxu0 %v263
    %500 = vmatpush1.msra.mxu0 %v262
    %501 = vmatprep.subr.mxu0 %v266
    %502 = vmatpush1.msra.mxu0 %v265
    %503 = vmatprep.subr.mxu0 %v269
    %504 = vmatpush1.msra.mxu0 %v268
    %505 = vmatprep.subr.mxu0 %v272
    %506 = vmatpush1.msra.mxu0 %v271
    %507 = vmatprep.subr.mxu0 %v275
    %508 = vmatpush1.msra.mxu0 %v274
    %509 = vmatprep.subr.mxu0 %v278
    %510 = vmatpush1.msra.mxu0 %v277
    %511 = vmatprep.subr.mxu0 0.0
    %512 = vmatpush1.msra.mxu0 0.0
    %513 = vmatprep.subr.mxu0 0.0
    %514 = vmatpush1.msra.mxu0 0.0
    %515 = vmatprep.subr.mxu0 0.0
    %516 = vmatpush1.msra.mxu0 0.0
    %517 = vmatprep.subr.mxu0 0.0
    %518 = vmatpush1.msra.mxu0 0.0
    %519 = vmatprep.subr.mxu0 0.0
    %520 = vmatpush1.msra.mxu0 0.0
    %521 = vmatprep.subr.mxu0 0.0
    %522 = vmatpush1.msra.mxu0 0.0
    %523 = vmatprep.subr.mxu0 0.0
    %524 = vmatpush1.msra.mxu0 0.0
    %525 = vmatprep.subr.mxu0 0.0
    %526 = vmatpush1.msra.mxu0 0.0
    %527 = vmatprep.subr.mxu0 0.0
    %528 = vmatpush1.msra.mxu0 0.0
    %529 = vmatprep.subr.mxu0 0.0
    %530 = vmatpush1.msra.mxu0 0.0
    %531 = vmatprep.subr.mxu0 0.0
    %532 = vmatpush1.msra.mxu0 0.0
    %533 = vmatprep.subr.mxu0 0.0
    %534 = vmatpush1.msra.mxu0 0.0
    %535 = vmatprep.subr.mxu0 0.0
    %536 = vmatpush1.msra.mxu0 0.0
    %537 = vmatprep.subr.mxu0 0.0
    %538 = vmatpush1.msra.mxu0 0.0
    %539 = vmatprep.subr.mxu0 0.0
    %540 = vmatpush1.msra.mxu0 0.0
    %541 = vmatprep.subr.mxu0 0.0
    %542 = vmatpush1.msra.mxu0 0.0
    %543 = vmatprep.mubr.f32.mxu0 0.0
    %544 = vmatmul.mubr.f32.gmra.mrb[0].mxu0 %v476
    %v545 = vpop.f32.mrb[0].mxu0
    %v546 = vadd.f32 %v286, %v545
    %v547 = vpop.f32.mrb[0].mxu0
    %v548 = vadd.f32 %v290, %v547
    %549 = vdwg.mxu0
    %550 = vmatprep.subr.mxu0 0.0
    %551 = vmatpush1.msra.mxu0 %v234
    %552 = vmatprep.subr.mxu0 0.0
    %553 = vmatpush1.msra.mxu0 %v237
    %554 = vmatprep.subr.mxu0 0.0
    %555 = vmatpush1.msra.mxu0 %v240
    %556 = vmatprep.subr.mxu0 0.0
    %557 = vmatpush1.msra.mxu0 %v243
    %558 = vmatprep.subr.mxu0 0.0
    %559 = vmatpush1.msra.mxu0 %v246
    %560 = vmatprep.subr.mxu0 0.0
    %561 = vmatpush1.msra.mxu0 %v249
    %562 = vmatprep.subr.mxu0 0.0
    %563 = vmatpush1.msra.mxu0 %v252
    %564 = vmatprep.subr.mxu0 0.0
    %565 = vmatpush1.msra.mxu0 %v255
    %566 = vmatprep.subr.mxu0 0.0
    %567 = vmatpush1.msra.mxu0 %v258
    %568 = vmatprep.subr.mxu0 0.0
    %569 = vmatpush1.msra.mxu0 %v261
    %570 = vmatprep.subr.mxu0 0.0
    %571 = vmatpush1.msra.mxu0 %v264
    %572 = vmatprep.subr.mxu0 0.0
    %573 = vmatpush1.msra.mxu0 %v267
    %574 = vmatprep.subr.mxu0 0.0
    %575 = vmatpush1.msra.mxu0 %v270
    %576 = vmatprep.subr.mxu0 0.0
    %577 = vmatpush1.msra.mxu0 %v273
    %578 = vmatprep.subr.mxu0 0.0
    %579 = vmatpush1.msra.mxu0 %v276
    %580 = vmatprep.subr.mxu0 0.0
    %581 = vmatpush1.msra.mxu0 %v279
    %582 = vmatprep.subr.mxu0 0.0
    %583 = vmatpush1.msra.mxu0 0.0
    %584 = vmatprep.subr.mxu0 0.0
    %585 = vmatpush1.msra.mxu0 0.0
    %586 = vmatprep.subr.mxu0 0.0
    %587 = vmatpush1.msra.mxu0 0.0
    %588 = vmatprep.subr.mxu0 0.0
    %589 = vmatpush1.msra.mxu0 0.0
    %590 = vmatprep.subr.mxu0 0.0
    %591 = vmatpush1.msra.mxu0 0.0
    %592 = vmatprep.subr.mxu0 0.0
    %593 = vmatpush1.msra.mxu0 0.0
    %594 = vmatprep.subr.mxu0 0.0
    %595 = vmatpush1.msra.mxu0 0.0
    %596 = vmatprep.subr.mxu0 0.0
    %597 = vmatpush1.msra.mxu0 0.0
    %598 = vmatprep.subr.mxu0 0.0
    %599 = vmatpush1.msra.mxu0 0.0
    %600 = vmatprep.subr.mxu0 0.0
    %601 = vmatpush1.msra.mxu0 0.0
    %602 = vmatprep.subr.mxu0 0.0
    %603 = vmatpush1.msra.mxu0 0.0
    %604 = vmatprep.subr.mxu0 0.0
    %605 = vmatpush1.msra.mxu0 0.0
    %606 = vmatprep.subr.mxu0 0.0
    %607 = vmatpush1.msra.mxu0 0.0
    %608 = vmatprep.subr.mxu0 0.0
    %609 = vmatpush1.msra.mxu0 0.0
    %610 = vmatprep.subr.mxu0 0.0
    %611 = vmatpush1.msra.mxu0 0.0
    %612 = vmatprep.subr.mxu0 0.0
    %613 = vmatpush1.msra.mxu0 0.0
    %614 = vmatprep.mubr.f32.mxu0 0.0
    %615 = vmatmul.mubr.f32.gmra.mrb[0].mxu0 %v476
    %v616 = vpop.f32.mrb[0].mxu0
    %v617 = vadd.f32 %v294, %v616
    %v618 = vpop.f32.mrb[0].mxu0
    %619 = vdwg.mxu0
    %v622 = vcombine.low %v546, %v548
    %v624 = vunpack.c.l.s4 1966171168
    %v625 = vunpack.c.0.s8 %v624
    %v626 = vlaneseq
    %v627 = vshrl.u32 %v626, 7
    %v628 = vsub.s32 %v625, %v627
    %v629 = vrot.slane %v622, %v628
    %v631 = vunpack.c.l.s4 1966171168
    %v632 = vunpack.c.0.s8 %v631
    %v633 = vlaneseq
    %v634 = vshrl.u32 %v633, 7
    %v635 = vsub.s32 %v632, %v634
    %v636 = vrot.slane %v629, %v635
    %v638 = vadd.f32 %v478, %v636
    %v639 = vxor.u32 %v638, 2147483648
    %v640 = vmul.f32 %v639, 1.442695
    %v641 = vpow.pop %v640
    %v642 = vadd.f32 %v641, 1.0
    %v643 = vrcp.pop %v642
    %v644 = vmul.f32 1.0, %v643
    %v645 = vmul.f32 %v644, %v617
    %v647 = vrot.slane %v478, 2
    %v649 = vadd.f32 %v647, %v645
    %v650 = vtanh.pop %v649
    %v652 = vrot.slane %v644, 1
    %v654 = vsub.f32 1.0, %v652
    %v655 = vmul.f32 %v654, %v650
    %v656 = vmul.f32 %v652, %v476
    %v657 = vadd.f32 %v655, %v656
    %s658 = scalar_lea.vmem [#allocation2], 2
    %v659 = vld [vmem:[%s658] ss:$8 sm:$0x7]
    %660 = vmatprep.subr.mxu0 %v233
    %661 = vmatpush1.msra.mxu0 %v232
    %662 = vmatprep.subr.mxu0 %v236
    %663 = vmatpush1.msra.mxu0 %v235
    %664 = vmatprep.subr.mxu0 %v239
    %665 = vmatpush1.msra.mxu0 %v238
    %666 = vmatprep.subr.mxu0 %v242
    %667 = vmatpush1.msra.mxu0 %v241
    %668 = vmatprep.subr.mxu0 %v245
    %669 = vmatpush1.msra.mxu0 %v244
    %670 = vmatprep.subr.mxu0 %v248
    %671 = vmatpush1.msra.mxu0 %v247
    %672 = vmatprep.subr.mxu0 %v251
    %673 = vmatpush1.msra.mxu0 %v250
    %674 = vmatprep.subr.mxu0 %v254
    %675 = vmatpush1.msra.mxu0 %v253
    %676 = vmatprep.subr.mxu0 %v257
    %677 = vmatpush1.msra.mxu0 %v256
    %678 = vmatprep.subr.mxu0 %v260
    %679 = vmatpush1.msra.mxu0 %v259
    %680 = vmatprep.subr.mxu0 %v263
    %681 = vmatpush1.msra.mxu0 %v262
    %682 = vmatprep.subr.mxu0 %v266
    %683 = vmatpush1.msra.mxu0 %v265
    %684 = vmatprep.subr.mxu0 %v269
    %685 = vmatpush1.msra.mxu0 %v268
    %686 = vmatprep.subr.mxu0 %v272
    %687 = vmatpush1.msra.mxu0 %v271
    %688 = vmatprep.subr.mxu0 %v275
    %689 = vmatpush1.msra.mxu0 %v274
    %690 = vmatprep.subr.mxu0 %v278
    %691 = vmatpush1.msra.mxu0 %v277
    %692 = vmatprep.subr.mxu0 0.0
    %693 = vmatpush1.msra.mxu0 0.0
    %694 = vmatprep.subr.mxu0 0.0
    %695 = vmatpush1.msra.mxu0 0.0
    %696 = vmatprep.subr.mxu0 0.0
    %697 = vmatpush1.msra.mxu0 0.0
    %698 = vmatprep.subr.mxu0 0.0
    %699 = vmatpush1.msra.mxu0 0.0
    %700 = vmatprep.subr.mxu0 0.0
    %701 = vmatpush1.msra.mxu0 0.0
    %702 = vmatprep.subr.mxu0 0.0
    %703 = vmatpush1.msra.mxu0 0.0
    %704 = vmatprep.subr.mxu0 0.0
    %705 = vmatpush1.msra.mxu0 0.0
    %706 = vmatprep.subr.mxu0 0.0
    %707 = vmatpush1.msra.mxu0 0.0
    %708 = vmatprep.subr.mxu0 0.0
    %709 = vmatpush1.msra.mxu0 0.0
    %710 = vmatprep.subr.mxu0 0.0
    %711 = vmatpush1.msra.mxu0 0.0
    %712 = vmatprep.subr.mxu0 0.0
    %713 = vmatpush1.msra.mxu0 0.0
    %714 = vmatprep.subr.mxu0 0.0
    %715 = vmatpush1.msra.mxu0 0.0
    %716 = vmatprep.subr.mxu0 0.0
    %717 = vmatpush1.msra.mxu0 0.0
    %718 = vmatprep.subr.mxu0 0.0
    %719 = vmatpush1.msra.mxu0 0.0
    %720 = vmatprep.subr.mxu0 0.0
    %721 = vmatpush1.msra.mxu0 0.0
    %722 = vmatprep.subr.mxu0 0.0
    %723 = vmatpush1.msra.mxu0 0.0
    %724 = vmatprep.mubr.f32.mxu0 0.0
    %725 = vmatmul.mubr.f32.gmra.mrb[0].mxu0 %v657
    %v726 = vpop.f32.mrb[0].mxu0
    %v727 = vadd.f32 %v286, %v726
    %v728 = vpop.f32.mrb[0].mxu0
    %v729 = vadd.f32 %v290, %v728
    %730 = vdwg.mxu0
    %731 = vmatprep.subr.mxu0 0.0
    %732 = vmatpush1.msra.mxu0 %v234
    %733 = vmatprep.subr.mxu0 0.0
    %734 = vmatpush1.msra.mxu0 %v237
    %735 = vmatprep.subr.mxu0 0.0
    %736 = vmatpush1.msra.mxu0 %v240
    %737 = vmatprep.subr.mxu0 0.0
    %738 = vmatpush1.msra.mxu0 %v243
    %739 = vmatprep.subr.mxu0 0.0
    %740 = vmatpush1.msra.mxu0 %v246
    %741 = vmatprep.subr.mxu0 0.0
    %742 = vmatpush1.msra.mxu0 %v249
    %743 = vmatprep.subr.mxu0 0.0
    %744 = vmatpush1.msra.mxu0 %v252
    %745 = vmatprep.subr.mxu0 0.0
    %746 = vmatpush1.msra.mxu0 %v255
    %747 = vmatprep.subr.mxu0 0.0
    %748 = vmatpush1.msra.mxu0 %v258
    %749 = vmatprep.subr.mxu0 0.0
    %750 = vmatpush1.msra.mxu0 %v261
    %751 = vmatprep.subr.mxu0 0.0
    %752 = vmatpush1.msra.mxu0 %v264
    %753 = vmatprep.subr.mxu0 0.0
    %754 = vmatpush1.msra.mxu0 %v267
    %755 = vmatprep.subr.mxu0 0.0
    %756 = vmatpush1.msra.mxu0 %v270
    %757 = vmatprep.subr.mxu0 0.0
    %758 = vmatpush1.msra.mxu0 %v273
    %759 = vmatprep.subr.mxu0 0.0
    %760 = vmatpush1.msra.mxu0 %v276
    %761 = vmatprep.subr.mxu0 0.0
    %762 = vmatpush1.msra.mxu0 %v279
    %763 = vmatprep.subr.mxu0 0.0
    %764 = vmatpush1.msra.mxu0 0.0
    %765 = vmatprep.subr.mxu0 0.0
    %766 = vmatpush1.msra.mxu0 0.0
    %767 = vmatprep.subr.mxu0 0.0
    %768 = vmatpush1.msra.mxu0 0.0
    %769 = vmatprep.subr.mxu0 0.0
    %770 = vmatpush1.msra.mxu0 0.0
    %771 = vmatprep.subr.mxu0 0.0
    %772 = vmatpush1.msra.mxu0 0.0
    %773 = vmatprep.subr.mxu0 0.0
    %774 = vmatpush1.msra.mxu0 0.0
    %775 = vmatprep.subr.mxu0 0.0
    %776 = vmatpush1.msra.mxu0 0.0
    %777 = vmatprep.subr.mxu0 0.0
    %778 = vmatpush1.msra.mxu0 0.0
    %779 = vmatprep.subr.mxu0 0.0
    %780 = vmatpush1.msra.mxu0 0.0
    %781 = vmatprep.subr.mxu0 0.0
    %782 = vmatpush1.msra.mxu0 0.0
    %783 = vmatprep.subr.mxu0 0.0
    %784 = vmatpush1.msra.mxu0 0.0
    %785 = vmatprep.subr.mxu0 0.0
    %786 = vmatpush1.msra.mxu0 0.0
    %787 = vmatprep.subr.mxu0 0.0
    %788 = vmatpush1.msra.mxu0 0.0
    %789 = vmatprep.subr.mxu0 0.0
    %790 = vmatpush1.msra.mxu0 0.0
    %791 = vmatprep.subr.mxu0 0.0
    %792 = vmatpush1.msra.mxu0 0.0
    %793 = vmatprep.subr.mxu0 0.0
    %794 = vmatpush1.msra.mxu0 0.0
    %795 = vmatprep.mubr.f32.mxu0 0.0
    %796 = vmatmul.mubr.f32.gmra.mrb[0].mxu0 %v657
    %v797 = vpop.f32.mrb[0].mxu0
    %v798 = vadd.f32 %v294, %v797
    %v799 = vpop.f32.mrb[0].mxu0
    %800 = vdwg.mxu0
    %v803 = vcombine.low %v727, %v729
    %v805 = vunpack.c.l.s4 1966171168
    %v806 = vunpack.c.0.s8 %v805
    %v807 = vlaneseq
    %v808 = vshrl.u32 %v807, 7
    %v809 = vsub.s32 %v806, %v808
    %v810 = vrot.slane %v803, %v809
    %v812 = vunpack.c.l.s4 1966171168
    %v813 = vunpack.c.0.s8 %v812
    %v814 = vlaneseq
    %v815 = vshrl.u32 %v814, 7
    %v816 = vsub.s32 %v813, %v815
    %v817 = vrot.slane %v810, %v816
    %v819 = vadd.f32 %v659, %v817
    %v820 = vxor.u32 %v819, 2147483648
    %v821 = vmul.f32 %v820, 1.442695
    %v822 = vpow.pop %v821
    %v823 = vadd.f32 %v822, 1.0
    %v824 = vrcp.pop %v823
    %v825 = vmul.f32 1.0, %v824
    %v826 = vmul.f32 %v825, %v798
    %v828 = vrot.slane %v659, 2
    %v830 = vadd.f32 %v828, %v826
    %v831 = vtanh.pop %v830
    %v833 = vrot.slane %v825, 1
    %v835 = vsub.f32 1.0, %v833
    %v836 = vmul.f32 %v835, %v831
    %v837 = vmul.f32 %v833, %v657
    %v838 = vadd.f32 %v836, %v837
    %s839 = scalar_lea.vmem [#allocation2], 3
    %v840 = vld [vmem:[%s839] ss:$8 sm:$0x7]
    %841 = vmatprep.subr.mxu0 %v233
    %842 = vmatpush1.msra.mxu0 %v232
    %843 = vmatprep.subr.mxu0 %v236
    %844 = vmatpush1.msra.mxu0 %v235
    %845 = vmatprep.subr.mxu0 %v239
    %846 = vmatpush1.msra.mxu0 %v238
    %847 = vmatprep.subr.mxu0 %v242
    %848 = vmatpush1.msra.mxu0 %v241
    %849 = vmatprep.subr.mxu0 %v245
    %850 = vmatpush1.msra.mxu0 %v244
    %851 = vmatprep.subr.mxu0 %v248
    %852 = vmatpush1.msra.mxu0 %v247
    %853 = vmatprep.subr.mxu0 %v251
    %854 = vmatpush1.msra.mxu0 %v250
    %855 = vmatprep.subr.mxu0 %v254
    %856 = vmatpush1.msra.mxu0 %v253
    %857 = vmatprep.subr.mxu0 %v257
    %858 = vmatpush1.msra.mxu0 %v256
    %859 = vmatprep.subr.mxu0 %v260
    %860 = vmatpush1.msra.mxu0 %v259
    %861 = vmatprep.subr.mxu0 %v263
    %862 = vmatpush1.msra.mxu0 %v262
    %863 = vmatprep.subr.mxu0 %v266
    %864 = vmatpush1.msra.mxu0 %v265
    %865 = vmatprep.subr.mxu0 %v269
    %866 = vmatpush1.msra.mxu0 %v268
    %867 = vmatprep.subr.mxu0 %v272
    %868 = vmatpush1.msra.mxu0 %v271
    %869 = vmatprep.subr.mxu0 %v275
    %870 = vmatpush1.msra.mxu0 %v274
    %871 = vmatprep.subr.mxu0 %v278
    %872 = vmatpush1.msra.mxu0 %v277
    %873 = vmatprep.subr.mxu0 0.0
    %874 = vmatpush1.msra.mxu0 0.0
    %875 = vmatprep.subr.mxu0 0.0
    %876 = vmatpush1.msra.mxu0 0.0
    %877 = vmatprep.subr.mxu0 0.0
    %878 = vmatpush1.msra.mxu0 0.0
    %879 = vmatprep.subr.mxu0 0.0
    %880 = vmatpush1.msra.mxu0 0.0
    %881 = vmatprep.subr.mxu0 0.0
    %882 = vmatpush1.msra.mxu0 0.0
    %883 = vmatprep.subr.mxu0 0.0
    %884 = vmatpush1.msra.mxu0 0.0
    %885 = vmatprep.subr.mxu0 0.0
    %886 = vmatpush1.msra.mxu0 0.0
    %887 = vmatprep.subr.mxu0 0.0
    %888 = vmatpush1.msra.mxu0 0.0
    %889 = vmatprep.subr.mxu0 0.0
    %890 = vmatpush1.msra.mxu0 0.0
    %891 = vmatprep.subr.mxu0 0.0
    %892 = vmatpush1.msra.mxu0 0.0
    %893 = vmatprep.subr.mxu0 0.0
    %894 = vmatpush1.msra.mxu0 0.0
    %895 = vmatprep.subr.mxu0 0.0
    %896 = vmatpush1.msra.mxu0 0.0
    %897 = vmatprep.subr.mxu0 0.0
    %898 = vmatpush1.msra.mxu0 0.0
    %899 = vmatprep.subr.mxu0 0.0
    %900 = vmatpush1.msra.mxu0 0.0
    %901 = vmatprep.subr.mxu0 0.0
    %902 = vmatpush1.msra.mxu0 0.0
    %903 = vmatprep.subr.mxu0 0.0
    %904 = vmatpush1.msra.mxu0 0.0
    %905 = vmatprep.mubr.f32.mxu0 0.0
    %906 = vmatmul.mubr.f32.gmra.mrb[0].mxu0 %v838
    %v907 = vpop.f32.mrb[0].mxu0
    %v908 = vadd.f32 %v286, %v907
    %v909 = vpop.f32.mrb[0].mxu0
    %v910 = vadd.f32 %v290, %v909
    %911 = vdwg.mxu0
    %912 = vmatprep.subr.mxu0 0.0
    %913 = vmatpush1.msra.mxu0 %v234
    %914 = vmatprep.subr.mxu0 0.0
    %915 = vmatpush1.msra.mxu0 %v237
    %916 = vmatprep.subr.mxu0 0.0
    %917 = vmatpush1.msra.mxu0 %v240
    %918 = vmatprep.subr.mxu0 0.0
    %919 = vmatpush1.msra.mxu0 %v243
    %920 = vmatprep.subr.mxu0 0.0
    %921 = vmatpush1.msra.mxu0 %v246
    %922 = vmatprep.subr.mxu0 0.0
    %923 = vmatpush1.msra.mxu0 %v249
    %924 = vmatprep.subr.mxu0 0.0
    %925 = vmatpush1.msra.mxu0 %v252
    %926 = vmatprep.subr.mxu0 0.0
    %927 = vmatpush1.msra.mxu0 %v255
    %928 = vmatprep.subr.mxu0 0.0
    %929 = vmatpush1.msra.mxu0 %v258
    %930 = vmatprep.subr.mxu0 0.0
    %931 = vmatpush1.msra.mxu0 %v261
    %932 = vmatprep.subr.mxu0 0.0
    %933 = vmatpush1.msra.mxu0 %v264
    %934 = vmatprep.subr.mxu0 0.0
    %935 = vmatpush1.msra.mxu0 %v267
    %936 = vmatprep.subr.mxu0 0.0
    %937 = vmatpush1.msra.mxu0 %v270
    %938 = vmatprep.subr.mxu0 0.0
    %939 = vmatpush1.msra.mxu0 %v273
    %940 = vmatprep.subr.mxu0 0.0
    %941 = vmatpush1.msra.mxu0 %v276
    %942 = vmatprep.subr.mxu0 0.0
    %943 = vmatpush1.msra.mxu0 %v279
    %944 = vmatprep.subr.mxu0 0.0
    %945 = vmatpush1.msra.mxu0 0.0
    %946 = vmatprep.subr.mxu0 0.0
    %947 = vmatpush1.msra.mxu0 0.0
    %948 = vmatprep.subr.mxu0 0.0
    %949 = vmatpush1.msra.mxu0 0.0
    %950 = vmatprep.subr.mxu0 0.0
    %951 = vmatpush1.msra.mxu0 0.0
    %952 = vmatprep.subr.mxu0 0.0
    %953 = vmatpush1.msra.mxu0 0.0
    %954 = vmatprep.subr.mxu0 0.0
    %955 = vmatpush1.msra.mxu0 0.0
    %956 = vmatprep.subr.mxu0 0.0
    %957 = vmatpush1.msra.mxu0 0.0
    %958 = vmatprep.subr.mxu0 0.0
    %959 = vmatpush1.msra.mxu0 0.0
    %960 = vmatprep.subr.mxu0 0.0
    %961 = vmatpush1.msra.mxu0 0.0
    %962 = vmatprep.subr.mxu0 0.0
    %963 = vmatpush1.msra.mxu0 0.0
    %964 = vmatprep.subr.mxu0 0.0
    %965 = vmatpush1.msra.mxu0 0.0
    %966 = vmatprep.subr.mxu0 0.0
    %967 = vmatpush1.msra.mxu0 0.0
    %968 = vmatprep.subr.mxu0 0.0
    %969 = vmatpush1.msra.mxu0 0.0
    %970 = vmatprep.subr.mxu0 0.0
    %971 = vmatpush1.msra.mxu0 0.0
    %972 = vmatprep.subr.mxu0 0.0
    %973 = vmatpush1.msra.mxu0 0.0
    %974 = vmatprep.subr.mxu0 0.0
    %975 = vmatpush1.msra.mxu0 0.0
    %976 = vmatprep.mubr.f32.mxu0 0.0
    %977 = vmatmul.mubr.f32.gmra.mrb[0].mxu0 %v838
    %v978 = vpop.f32.mrb[0].mxu0
    %v979 = vadd.f32 %v294, %v978
    %v980 = vpop.f32.mrb[0].mxu0
    %981 = vdwg.mxu0
    %v984 = vcombine.low %v908, %v910
    %v986 = vunpack.c.l.s4 1966171168
    %v987 = vunpack.c.0.s8 %v986
    %v988 = vlaneseq
    %v989 = vshrl.u32 %v988, 7
    %v990 = vsub.s32 %v987, %v989
    %v991 = vrot.slane %v984, %v990
    %v993 = vunpack.c.l.s4 1966171168
    %v994 = vunpack.c.0.s8 %v993
    %v995 = vlaneseq
    %v996 = vshrl.u32 %v995, 7
    %v997 = vsub.s32 %v994, %v996
    %v998 = vrot.slane %v991, %v997
    %v1000 = vadd.f32 %v840, %v998
    %v1001 = vxor.u32 %v1000, 2147483648
    %v1002 = vmul.f32 %v1001, 1.442695
    %v1003 = vpow.pop %v1002
    %v1004 = vadd.f32 %v1003, 1.0
    %v1005 = vrcp.pop %v1004
    %v1006 = vmul.f32 1.0, %v1005
    %v1007 = vmul.f32 %v1006, %v979
    %v1009 = vrot.slane %v840, 2
    %v1011 = vadd.f32 %v1009, %v1007
    %v1012 = vtanh.pop %v1011
    %v1014 = vrot.slane %v1006, 1
    %v1016 = vsub.f32 1.0, %v1014
    %v1017 = vmul.f32 %v1016, %v1012
    %v1018 = vmul.f32 %v1014, %v838
    %v1019 = vadd.f32 %v1017, %v1018
    %s1020 = scalar_lea.vmem [#allocation2], 4
    %v1021 = vld [vmem:[%s1020] ss:$8 sm:$0x7]
    %1022 = vmatprep.subr.mxu0 %v233
    %1023 = vmatpush1.msra.mxu0 %v232
    %1024 = vmatprep.subr.mxu0 %v236
    %1025 = vmatpush1.msra.mxu0 %v235
    %1026 = vmatprep.subr.mxu0 %v239
    %1027 = vmatpush1.msra.mxu0 %v238
    %1028 = vmatprep.subr.mxu0 %v242
    %1029 = vmatpush1.msra.mxu0 %v241
    %1030 = vmatprep.subr.mxu0 %v245
    %1031 = vmatpush1.msra.mxu0 %v244
    %1032 = vmatprep.subr.mxu0 %v248
    %1033 = vmatpush1.msra.mxu0 %v247
    %1034 = vmatprep.subr.mxu0 %v251
    %1035 = vmatpush1.msra.mxu0 %v250
    %1036 = vmatprep.subr.mxu0 %v254
    %1037 = vmatpush1.msra.mxu0 %v253
    %1038 = vmatprep.subr.mxu0 %v257
    %1039 = vmatpush1.msra.mxu0 %v256
    %1040 = vmatprep.subr.mxu0 %v260
    %1041 = vmatpush1.msra.mxu0 %v259
    %1042 = vmatprep.subr.mxu0 %v263
    %1043 = vmatpush1.msra.mxu0 %v262
    %1044 = vmatprep.subr.mxu0 %v266
    %1045 = vmatpush1.msra.mxu0 %v265
    %1046 = vmatprep.subr.mxu0 %v269
    %1047 = vmatpush1.msra.mxu0 %v268
    %1048 = vmatprep.subr.mxu0 %v272
    %1049 = vmatpush1.msra.mxu0 %v271
    %1050 = vmatprep.subr.mxu0 %v275
    %1051 = vmatpush1.msra.mxu0 %v274
    %1052 = vmatprep.subr.mxu0 %v278
    %1053 = vmatpush1.msra.mxu0 %v277
    %1054 = vmatprep.subr.mxu0 0.0
    %1055 = vmatpush1.msra.mxu0 0.0
    %1056 = vmatprep.subr.mxu0 0.0
    %1057 = vmatpush1.msra.mxu0 0.0
    %1058 = vmatprep.subr.mxu0 0.0
    %1059 = vmatpush1.msra.mxu0 0.0
    %1060 = vmatprep.subr.mxu0 0.0
    %1061 = vmatpush1.msra.mxu0 0.0
    %1062 = vmatprep.subr.mxu0 0.0
    %1063 = vmatpush1.msra.mxu0 0.0
    %1064 = vmatprep.subr.mxu0 0.0
    %1065 = vmatpush1.msra.mxu0 0.0
    %1066 = vmatprep.subr.mxu0 0.0
    %1067 = vmatpush1.msra.mxu0 0.0
    %1068 = vmatprep.subr.mxu0 0.0
    %1069 = vmatpush1.msra.mxu0 0.0
    %1070 = vmatprep.subr.mxu0 0.0
    %1071 = vmatpush1.msra.mxu0 0.0
    %1072 = vmatprep.subr.mxu0 0.0
    %1073 = vmatpush1.msra.mxu0 0.0
    %1074 = vmatprep.subr.mxu0 0.0
    %1075 = vmatpush1.msra.mxu0 0.0
    %1076 = vmatprep.subr.mxu0 0.0
    %1077 = vmatpush1.msra.mxu0 0.0
    %1078 = vmatprep.subr.mxu0 0.0
    %1079 = vmatpush1.msra.mxu0 0.0
    %1080 = vmatprep.subr.mxu0 0.0
    %1081 = vmatpush1.msra.mxu0 0.0
    %1082 = vmatprep.subr.mxu0 0.0
    %1083 = vmatpush1.msra.mxu0 0.0
    %1084 = vmatprep.subr.mxu0 0.0
    %1085 = vmatpush1.msra.mxu0 0.0
    %1086 = vmatprep.mubr.f32.mxu0 0.0
    %1087 = vmatmul.mubr.f32.gmra.mrb[0].mxu0 %v1019
    %v1088 = vpop.f32.mrb[0].mxu0
    %v1089 = vadd.f32 %v286, %v1088
    %v1090 = vpop.f32.mrb[0].mxu0
    %v1091 = vadd.f32 %v290, %v1090
    %1092 = vdwg.mxu0
    %1093 = vmatprep.subr.mxu0 0.0
    %1094 = vmatpush1.msra.mxu0 %v234
    %1095 = vmatprep.subr.mxu0 0.0
    %1096 = vmatpush1.msra.mxu0 %v237
    %1097 = vmatprep.subr.mxu0 0.0
    %1098 = vmatpush1.msra.mxu0 %v240
    %1099 = vmatprep.subr.mxu0 0.0
    %1100 = vmatpush1.msra.mxu0 %v243
    %1101 = vmatprep.subr.mxu0 0.0
    %1102 = vmatpush1.msra.mxu0 %v246
    %1103 = vmatprep.subr.mxu0 0.0
    %1104 = vmatpush1.msra.mxu0 %v249
    %1105 = vmatprep.subr.mxu0 0.0
    %1106 = vmatpush1.msra.mxu0 %v252
    %1107 = vmatprep.subr.mxu0 0.0
    %1108 = vmatpush1.msra.mxu0 %v255
    %1109 = vmatprep.subr.mxu0 0.0
    %1110 = vmatpush1.msra.mxu0 %v258
    %1111 = vmatprep.subr.mxu0 0.0
    %1112 = vmatpush1.msra.mxu0 %v261
    %1113 = vmatprep.subr.mxu0 0.0
    %1114 = vmatpush1.msra.mxu0 %v264
    %1115 = vmatprep.subr.mxu0 0.0
    %1116 = vmatpush1.msra.mxu0 %v267
    %1117 = vmatprep.subr.mxu0 0.0
    %1118 = vmatpush1.msra.mxu0 %v270
    %1119 = vmatprep.subr.mxu0 0.0
    %1120 = vmatpush1.msra.mxu0 %v273
    %1121 = vmatprep.subr.mxu0 0.0
    %1122 = vmatpush1.msra.mxu0 %v276
    %1123 = vmatprep.subr.mxu0 0.0
    %1124 = vmatpush1.msra.mxu0 %v279
    %1125 = vmatprep.subr.mxu0 0.0
    %1126 = vmatpush1.msra.mxu0 0.0
    %1127 = vmatprep.subr.mxu0 0.0
    %1128 = vmatpush1.msra.mxu0 0.0
    %1129 = vmatprep.subr.mxu0 0.0
    %1130 = vmatpush1.msra.mxu0 0.0
    %1131 = vmatprep.subr.mxu0 0.0
    %1132 = vmatpush1.msra.mxu0 0.0
    %1133 = vmatprep.subr.mxu0 0.0
    %1134 = vmatpush1.msra.mxu0 0.0
    %1135 = vmatprep.subr.mxu0 0.0
    %1136 = vmatpush1.msra.mxu0 0.0
    %1137 = vmatprep.subr.mxu0 0.0
    %1138 = vmatpush1.msra.mxu0 0.0
    %1139 = vmatprep.subr.mxu0 0.0
    %1140 = vmatpush1.msra.mxu0 0.0
    %1141 = vmatprep.subr.mxu0 0.0
    %1142 = vmatpush1.msra.mxu0 0.0
    %1143 = vmatprep.subr.mxu0 0.0
    %1144 = vmatpush1.msra.mxu0 0.0
    %1145 = vmatprep.subr.mxu0 0.0
    %1146 = vmatpush1.msra.mxu0 0.0
    %1147 = vmatprep.subr.mxu0 0.0
    %1148 = vmatpush1.msra.mxu0 0.0
    %1149 = vmatprep.subr.mxu0 0.0
    %1150 = vmatpush1.msra.mxu0 0.0
    %1151 = vmatprep.subr.mxu0 0.0
    %1152 = vmatpush1.msra.mxu0 0.0
    %1153 = vmatprep.subr.mxu0 0.0
    %1154 = vmatpush1.msra.mxu0 0.0
    %1155 = vmatprep.subr.mxu0 0.0
    %1156 = vmatpush1.msra.mxu0 0.0
    %1157 = vmatprep.mubr.f32.mxu0 0.0
    %1158 = vmatmul.mubr.f32.gmra.mrb[0].mxu0 %v1019
    %v1159 = vpop.f32.mrb[0].mxu0
    %v1160 = vadd.f32 %v294, %v1159
    %v1161 = vpop.f32.mrb[0].mxu0
    %1162 = vdwg.mxu0
    %v1165 = vcombine.low %v1089, %v1091
    %v1167 = vunpack.c.l.s4 1966171168
    %v1168 = vunpack.c.0.s8 %v1167
    %v1169 = vlaneseq
    %v1170 = vshrl.u32 %v1169, 7
    %v1171 = vsub.s32 %v1168, %v1170
    %v1172 = vrot.slane %v1165, %v1171
    %v1174 = vunpack.c.l.s4 1966171168
    %v1175 = vunpack.c.0.s8 %v1174
    %v1176 = vlaneseq
    %v1177 = vshrl.u32 %v1176, 7
    %v1178 = vsub.s32 %v1175, %v1177
    %v1179 = vrot.slane %v1172, %v1178
    %v1181 = vadd.f32 %v1021, %v1179
    %v1182 = vxor.u32 %v1181, 2147483648
    %v1183 = vmul.f32 %v1182, 1.442695
    %v1184 = vpow.pop %v1183
    %v1185 = vadd.f32 %v1184, 1.0
    %v1186 = vrcp.pop %v1185
    %v1187 = vmul.f32 1.0, %v1186
    %v1188 = vmul.f32 %v1187, %v1160
    %v1190 = vrot.slane %v1021, 2
    %v1192 = vadd.f32 %v1190, %v1188
    %v1193 = vtanh.pop %v1192
    %v1195 = vrot.slane %v1187, 1
    %v1197 = vsub.f32 1.0, %v1195
    %v1198 = vmul.f32 %v1197, %v1193
    %v1199 = vmul.f32 %v1195, %v1019
    %v1200 = vadd.f32 %v1198, %v1199
    %s1201 = scalar_lea.vmem [#allocation2], 5
    %v1202 = vld [vmem:[%s1201] ss:$8 sm:$0x7]
    %1203 = vmatprep.subr.mxu0 %v233
    %1204 = vmatpush1.msra.mxu0 %v232
    %1205 = vmatprep.subr.mxu0 %v236
    %1206 = vmatpush1.msra.mxu0 %v235
    %1207 = vmatprep.subr.mxu0 %v239
    %1208 = vmatpush1.msra.mxu0 %v238
    %1209 = vmatprep.subr.mxu0 %v242
    %1210 = vmatpush1.msra.mxu0 %v241
    %1211 = vmatprep.subr.mxu0 %v245
    %1212 = vmatpush1.msra.mxu0 %v244
    %1213 = vmatprep.subr.mxu0 %v248
    %1214 = vmatpush1.msra.mxu0 %v247
    %1215 = vmatprep.subr.mxu0 %v251
    %1216 = vmatpush1.msra.mxu0 %v250
    %1217 = vmatprep.subr.mxu0 %v254
    %1218 = vmatpush1.msra.mxu0 %v253
    %1219 = vmatprep.subr.mxu0 %v257
    %1220 = vmatpush1.msra.mxu0 %v256
    %1221 = vmatprep.subr.mxu0 %v260
    %1222 = vmatpush1.msra.mxu0 %v259
    %1223 = vmatprep.subr.mxu0 %v263
    %1224 = vmatpush1.msra.mxu0 %v262
    %1225 = vmatprep.subr.mxu0 %v266
    %1226 = vmatpush1.msra.mxu0 %v265
    %1227 = vmatprep.subr.mxu0 %v269
    %1228 = vmatpush1.msra.mxu0 %v268
    %1229 = vmatprep.subr.mxu0 %v272
    %1230 = vmatpush1.msra.mxu0 %v271
    %1231 = vmatprep.subr.mxu0 %v275
    %1232 = vmatpush1.msra.mxu0 %v274
    %1233 = vmatprep.subr.mxu0 %v278
    %1234 = vmatpush1.msra.mxu0 %v277
    %1235 = vmatprep.subr.mxu0 0.0
    %1236 = vmatpush1.msra.mxu0 0.0
    %1237 = vmatprep.subr.mxu0 0.0
    %1238 = vmatpush1.msra.mxu0 0.0
    %1239 = vmatprep.subr.mxu0 0.0
    %1240 = vmatpush1.msra.mxu0 0.0
    %1241 = vmatprep.subr.mxu0 0.0
    %1242 = vmatpush1.msra.mxu0 0.0
    %1243 = vmatprep.subr.mxu0 0.0
    %1244 = vmatpush1.msra.mxu0 0.0
    %1245 = vmatprep.subr.mxu0 0.0
    %1246 = vmatpush1.msra.mxu0 0.0
    %1247 = vmatprep.subr.mxu0 0.0
    %1248 = vmatpush1.msra.mxu0 0.0
    %1249 = vmatprep.subr.mxu0 0.0
    %1250 = vmatpush1.msra.mxu0 0.0
    %1251 = vmatprep.subr.mxu0 0.0
    %1252 = vmatpush1.msra.mxu0 0.0
    %1253 = vmatprep.subr.mxu0 0.0
    %1254 = vmatpush1.msra.mxu0 0.0
    %1255 = vmatprep.subr.mxu0 0.0
    %1256 = vmatpush1.msra.mxu0 0.0
    %1257 = vmatprep.subr.mxu0 0.0
    %1258 = vmatpush1.msra.mxu0 0.0
    %1259 = vmatprep.subr.mxu0 0.0
    %1260 = vmatpush1.msra.mxu0 0.0
    %1261 = vmatprep.subr.mxu0 0.0
    %1262 = vmatpush1.msra.mxu0 0.0
    %1263 = vmatprep.subr.mxu0 0.0
    %1264 = vmatpush1.msra.mxu0 0.0
    %1265 = vmatprep.subr.mxu0 0.0
    %1266 = vmatpush1.msra.mxu0 0.0
    %1267 = vmatprep.mubr.f32.mxu0 0.0
    %1268 = vmatmul.mubr.f32.gmra.mrb[0].mxu0 %v1200
    %v1269 = vpop.f32.mrb[0].mxu0
    %v1270 = vadd.f32 %v286, %v1269
    %v1271 = vpop.f32.mrb[0].mxu0
    %v1272 = vadd.f32 %v290, %v1271
    %1273 = vdwg.mxu0
    %1274 = vmatprep.subr.mxu0 0.0
    %1275 = vmatpush1.msra.mxu0 %v234
    %1276 = vmatprep.subr.mxu0 0.0
    %1277 = vmatpush1.msra.mxu0 %v237
    %1278 = vmatprep.subr.mxu0 0.0
    %1279 = vmatpush1.msra.mxu0 %v240
    %1280 = vmatprep.subr.mxu0 0.0
    %1281 = vmatpush1.msra.mxu0 %v243
    %1282 = vmatprep.subr.mxu0 0.0
    %1283 = vmatpush1.msra.mxu0 %v246
    %1284 = vmatprep.subr.mxu0 0.0
    %1285 = vmatpush1.msra.mxu0 %v249
    %1286 = vmatprep.subr.mxu0 0.0
    %1287 = vmatpush1.msra.mxu0 %v252
    %1288 = vmatprep.subr.mxu0 0.0
    %1289 = vmatpush1.msra.mxu0 %v255
    %1290 = vmatprep.subr.mxu0 0.0
    %1291 = vmatpush1.msra.mxu0 %v258
    %1292 = vmatprep.subr.mxu0 0.0
    %1293 = vmatpush1.msra.mxu0 %v261
    %1294 = vmatprep.subr.mxu0 0.0
    %1295 = vmatpush1.msra.mxu0 %v264
    %1296 = vmatprep.subr.mxu0 0.0
    %1297 = vmatpush1.msra.mxu0 %v267
    %1298 = vmatprep.subr.mxu0 0.0
    %1299 = vmatpush1.msra.mxu0 %v270
    %1300 = vmatprep.subr.mxu0 0.0
    %1301 = vmatpush1.msra.mxu0 %v273
    %1302 = vmatprep.subr.mxu0 0.0
    %1303 = vmatpush1.msra.mxu0 %v276
    %1304 = vmatprep.subr.mxu0 0.0
    %1305 = vmatpush1.msra.mxu0 %v279
    %1306 = vmatprep.subr.mxu0 0.0
    %1307 = vmatpush1.msra.mxu0 0.0
    %1308 = vmatprep.subr.mxu0 0.0
    %1309 = vmatpush1.msra.mxu0 0.0
    %1310 = vmatprep.subr.mxu0 0.0
    %1311 = vmatpush1.msra.mxu0 0.0
    %1312 = vmatprep.subr.mxu0 0.0
    %1313 = vmatpush1.msra.mxu0 0.0
    %1314 = vmatprep.subr.mxu0 0.0
    %1315 = vmatpush1.msra.mxu0 0.0
    %1316 = vmatprep.subr.mxu0 0.0
    %1317 = vmatpush1.msra.mxu0 0.0
    %1318 = vmatprep.subr.mxu0 0.0
    %1319 = vmatpush1.msra.mxu0 0.0
    %1320 = vmatprep.subr.mxu0 0.0
    %1321 = vmatpush1.msra.mxu0 0.0
    %1322 = vmatprep.subr.mxu0 0.0
    %1323 = vmatpush1.msra.mxu0 0.0
    %1324 = vmatprep.subr.mxu0 0.0
    %1325 = vmatpush1.msra.mxu0 0.0
    %1326 = vmatprep.subr.mxu0 0.0
    %1327 = vmatpush1.msra.mxu0 0.0
    %1328 = vmatprep.subr.mxu0 0.0
    %1329 = vmatpush1.msra.mxu0 0.0
    %1330 = vmatprep.subr.mxu0 0.0
    %1331 = vmatpush1.msra.mxu0 0.0
    %1332 = vmatprep.subr.mxu0 0.0
    %1333 = vmatpush1.msra.mxu0 0.0
    %1334 = vmatprep.subr.mxu0 0.0
    %1335 = vmatpush1.msra.mxu0 0.0
    %1336 = vmatprep.subr.mxu0 0.0
    %1337 = vmatpush1.msra.mxu0 0.0
    %1338 = vmatprep.mubr.f32.mxu0 0.0
    %1339 = vmatmul.mubr.f32.gmra.mrb[0].mxu0 %v1200
    %v1340 = vpop.f32.mrb[0].mxu0
    %v1341 = vadd.f32 %v294, %v1340
    %v1342 = vpop.f32.mrb[0].mxu0
    %1343 = vdwg.mxu0
    %v1346 = vcombine.low %v1270, %v1272
    %v1348 = vunpack.c.l.s4 1966171168
    %v1349 = vunpack.c.0.s8 %v1348
    %v1350 = vlaneseq
    %v1351 = vshrl.u32 %v1350, 7
    %v1352 = vsub.s32 %v1349, %v1351
    %v1353 = vrot.slane %v1346, %v1352
    %v1355 = vunpack.c.l.s4 1966171168
    %v1356 = vunpack.c.0.s8 %v1355
    %v1357 = vlaneseq
    %v1358 = vshrl.u32 %v1357, 7
    %v1359 = vsub.s32 %v1356, %v1358
    %v1360 = vrot.slane %v1353, %v1359
    %v1362 = vadd.f32 %v1202, %v1360
    %v1363 = vxor.u32 %v1362, 2147483648
    %v1364 = vmul.f32 %v1363, 1.442695
    %v1365 = vpow.pop %v1364
    %v1366 = vadd.f32 %v1365, 1.0
    %v1367 = vrcp.pop %v1366
    %v1368 = vmul.f32 1.0, %v1367
    %v1369 = vmul.f32 %v1368, %v1341
    %v1371 = vrot.slane %v1202, 2
    %v1373 = vadd.f32 %v1371, %v1369
    %v1374 = vtanh.pop %v1373
    %v1376 = vrot.slane %v1368, 1
    %v1378 = vsub.f32 1.0, %v1376
    %v1379 = vmul.f32 %v1378, %v1374
    %v1380 = vmul.f32 %v1376, %v1200
    %v1381 = vadd.f32 %v1379, %v1380
    %s1382 = scalar_lea.vmem [#allocation2], 6
    %v1383 = vld [vmem:[%s1382] ss:$8 sm:$0x7]
    %1384 = vmatprep.subr.mxu0 %v233
    %1385 = vmatpush1.msra.mxu0 %v232
    %1386 = vmatprep.subr.mxu0 %v236
    %1387 = vmatpush1.msra.mxu0 %v235
    %1388 = vmatprep.subr.mxu0 %v239
    %1389 = vmatpush1.msra.mxu0 %v238
    %1390 = vmatprep.subr.mxu0 %v242
    %1391 = vmatpush1.msra.mxu0 %v241
    %1392 = vmatprep.subr.mxu0 %v245
    %1393 = vmatpush1.msra.mxu0 %v244
    %1394 = vmatprep.subr.mxu0 %v248
    %1395 = vmatpush1.msra.mxu0 %v247
    %1396 = vmatprep.subr.mxu0 %v251
    %1397 = vmatpush1.msra.mxu0 %v250
    %1398 = vmatprep.subr.mxu0 %v254
    %1399 = vmatpush1.msra.mxu0 %v253
    %1400 = vmatprep.subr.mxu0 %v257
    %1401 = vmatpush1.msra.mxu0 %v256
    %1402 = vmatprep.subr.mxu0 %v260
    %1403 = vmatpush1.msra.mxu0 %v259
    %1404 = vmatprep.subr.mxu0 %v263
    %1405 = vmatpush1.msra.mxu0 %v262
    %1406 = vmatprep.subr.mxu0 %v266
    %1407 = vmatpush1.msra.mxu0 %v265
    %1408 = vmatprep.subr.mxu0 %v269
    %1409 = vmatpush1.msra.mxu0 %v268
    %1410 = vmatprep.subr.mxu0 %v272
    %1411 = vmatpush1.msra.mxu0 %v271
    %1412 = vmatprep.subr.mxu0 %v275
    %1413 = vmatpush1.msra.mxu0 %v274
    %1414 = vmatprep.subr.mxu0 %v278
    %1415 = vmatpush1.msra.mxu0 %v277
    %1416 = vmatprep.subr.mxu0 0.0
    %1417 = vmatpush1.msra.mxu0 0.0
    %1418 = vmatprep.subr.mxu0 0.0
    %1419 = vmatpush1.msra.mxu0 0.0
    %1420 = vmatprep.subr.mxu0 0.0
    %1421 = vmatpush1.msra.mxu0 0.0
    %1422 = vmatprep.subr.mxu0 0.0
    %1423 = vmatpush1.msra.mxu0 0.0
    %1424 = vmatprep.subr.mxu0 0.0
    %1425 = vmatpush1.msra.mxu0 0.0
    %1426 = vmatprep.subr.mxu0 0.0
    %1427 = vmatpush1.msra.mxu0 0.0
    %1428 = vmatprep.subr.mxu0 0.0
    %1429 = vmatpush1.msra.mxu0 0.0
    %1430 = vmatprep.subr.mxu0 0.0
    %1431 = vmatpush1.msra.mxu0 0.0
    %1432 = vmatprep.subr.mxu0 0.0
    %1433 = vmatpush1.msra.mxu0 0.0
    %1434 = vmatprep.subr.mxu0 0.0
    %1435 = vmatpush1.msra.mxu0 0.0
    %1436 = vmatprep.subr.mxu0 0.0
    %1437 = vmatpush1.msra.mxu0 0.0
    %1438 = vmatprep.subr.mxu0 0.0
    %1439 = vmatpush1.msra.mxu0 0.0
    %1440 = vmatprep.subr.mxu0 0.0
    %1441 = vmatpush1.msra.mxu0 0.0
    %1442 = vmatprep.subr.mxu0 0.0
    %1443 = vmatpush1.msra.mxu0 0.0
    %1444 = vmatprep.subr.mxu0 0.0
    %1445 = vmatpush1.msra.mxu0 0.0
    %1446 = vmatprep.subr.mxu0 0.0
    %1447 = vmatpush1.msra.mxu0 0.0
    %1448 = vmatprep.mubr.f32.mxu0 0.0
    %1449 = vmatmul.mubr.f32.gmra.mrb[0].mxu0 %v1381
    %v1450 = vpop.f32.mrb[0].mxu0
    %v1451 = vadd.f32 %v286, %v1450
    %v1452 = vpop.f32.mrb[0].mxu0
    %v1453 = vadd.f32 %v290, %v1452
    %1454 = vdwg.mxu0
    %1455 = vmatprep.subr.mxu0 0.0
    %1456 = vmatpush1.msra.mxu0 %v234
    %1457 = vmatprep.subr.mxu0 0.0
    %1458 = vmatpush1.msra.mxu0 %v237
    %1459 = vmatprep.subr.mxu0 0.0
    %1460 = vmatpush1.msra.mxu0 %v240
    %1461 = vmatprep.subr.mxu0 0.0
    %1462 = vmatpush1.msra.mxu0 %v243
    %1463 = vmatprep.subr.mxu0 0.0
    %1464 = vmatpush1.msra.mxu0 %v246
    %1465 = vmatprep.subr.mxu0 0.0
    %1466 = vmatpush1.msra.mxu0 %v249
    %1467 = vmatprep.subr.mxu0 0.0
    %1468 = vmatpush1.msra.mxu0 %v252
    %1469 = vmatprep.subr.mxu0 0.0
    %1470 = vmatpush1.msra.mxu0 %v255
    %1471 = vmatprep.subr.mxu0 0.0
    %1472 = vmatpush1.msra.mxu0 %v258
    %1473 = vmatprep.subr.mxu0 0.0
    %1474 = vmatpush1.msra.mxu0 %v261
    %1475 = vmatprep.subr.mxu0 0.0
    %1476 = vmatpush1.msra.mxu0 %v264
    %1477 = vmatprep.subr.mxu0 0.0
    %1478 = vmatpush1.msra.mxu0 %v267
    %1479 = vmatprep.subr.mxu0 0.0
    %1480 = vmatpush1.msra.mxu0 %v270
    %1481 = vmatprep.subr.mxu0 0.0
    %1482 = vmatpush1.msra.mxu0 %v273
    %1483 = vmatprep.subr.mxu0 0.0
    %1484 = vmatpush1.msra.mxu0 %v276
    %1485 = vmatprep.subr.mxu0 0.0
    %1486 = vmatpush1.msra.mxu0 %v279
    %1487 = vmatprep.subr.mxu0 0.0
    %1488 = vmatpush1.msra.mxu0 0.0
    %1489 = vmatprep.subr.mxu0 0.0
    %1490 = vmatpush1.msra.mxu0 0.0
    %1491 = vmatprep.subr.mxu0 0.0
    %1492 = vmatpush1.msra.mxu0 0.0
    %1493 = vmatprep.subr.mxu0 0.0
    %1494 = vmatpush1.msra.mxu0 0.0
    %1495 = vmatprep.subr.mxu0 0.0
    %1496 = vmatpush1.msra.mxu0 0.0
    %1497 = vmatprep.subr.mxu0 0.0
    %1498 = vmatpush1.msra.mxu0 0.0
    %1499 = vmatprep.subr.mxu0 0.0
    %1500 = vmatpush1.msra.mxu0 0.0
    %1501 = vmatprep.subr.mxu0 0.0
    %1502 = vmatpush1.msra.mxu0 0.0
    %1503 = vmatprep.subr.mxu0 0.0
    %1504 = vmatpush1.msra.mxu0 0.0
    %1505 = vmatprep.subr.mxu0 0.0
    %1506 = vmatpush1.msra.mxu0 0.0
    %1507 = vmatprep.subr.mxu0 0.0
    %1508 = vmatpush1.msra.mxu0 0.0
    %1509 = vmatprep.subr.mxu0 0.0
    %1510 = vmatpush1.msra.mxu0 0.0
    %1511 = vmatprep.subr.mxu0 0.0
    %1512 = vmatpush1.msra.mxu0 0.0
    %1513 = vmatprep.subr.mxu0 0.0
    %1514 = vmatpush1.msra.mxu0 0.0
    %1515 = vmatprep.subr.mxu0 0.0
    %1516 = vmatpush1.msra.mxu0 0.0
    %1517 = vmatprep.subr.mxu0 0.0
    %1518 = vmatpush1.msra.mxu0 0.0
    %1519 = vmatprep.mubr.f32.mxu0 0.0
    %1520 = vmatmul.mubr.f32.gmra.mrb[0].mxu0 %v1381
    %v1521 = vpop.f32.mrb[0].mxu0
    %v1522 = vadd.f32 %v294, %v1521
    %v1523 = vpop.f32.mrb[0].mxu0
    %1524 = vdwg.mxu0
    %v1527 = vcombine.low %v1451, %v1453
    %v1529 = vunpack.c.l.s4 1966171168
    %v1530 = vunpack.c.0.s8 %v1529
    %v1531 = vlaneseq
    %v1532 = vshrl.u32 %v1531, 7
    %v1533 = vsub.s32 %v1530, %v1532
    %v1534 = vrot.slane %v1527, %v1533
    %v1536 = vunpack.c.l.s4 1966171168
    %v1537 = vunpack.c.0.s8 %v1536
    %v1538 = vlaneseq
    %v1539 = vshrl.u32 %v1538, 7
    %v1540 = vsub.s32 %v1537, %v1539
    %v1541 = vrot.slane %v1534, %v1540
    %v1543 = vadd.f32 %v1383, %v1541
    %v1544 = vxor.u32 %v1543, 2147483648
    %v1545 = vmul.f32 %v1544, 1.442695
    %v1546 = vpow.pop %v1545
    %v1547 = vadd.f32 %v1546, 1.0
    %v1548 = vrcp.pop %v1547
    %v1549 = vmul.f32 1.0, %v1548
    %v1550 = vmul.f32 %v1549, %v1522
    %v1552 = vrot.slane %v1383, 2
    %v1554 = vadd.f32 %v1552, %v1550
    %v1555 = vtanh.pop %v1554
    %v1557 = vrot.slane %v1549, 1
    %v1559 = vsub.f32 1.0, %v1557
    %v1560 = vmul.f32 %v1559, %v1555
    %v1561 = vmul.f32 %v1557, %v1381
    %v1562 = vadd.f32 %v1560, %v1561
    %s1563 = scalar_lea.vmem [#allocation2], 7
    %v1564 = vld [vmem:[%s1563] ss:$8 sm:$0x7]
    %1565 = vmatprep.subr.mxu0 %v233
    %1566 = vmatpush1.msra.mxu0 %v232
    %1567 = vmatprep.subr.mxu0 %v236
    %1568 = vmatpush1.msra.mxu0 %v235
    %1569 = vmatprep.subr.mxu0 %v239
    %1570 = vmatpush1.msra.mxu0 %v238
    %1571 = vmatprep.subr.mxu0 %v242
    %1572 = vmatpush1.msra.mxu0 %v241
    %1573 = vmatprep.subr.mxu0 %v245
    %1574 = vmatpush1.msra.mxu0 %v244
    %1575 = vmatprep.subr.mxu0 %v248
    %1576 = vmatpush1.msra.mxu0 %v247
    %1577 = vmatprep.subr.mxu0 %v251
    %1578 = vmatpush1.msra.mxu0 %v250
    %1579 = vmatprep.subr.mxu0 %v254
    %1580 = vmatpush1.msra.mxu0 %v253
    %1581 = vmatprep.subr.mxu0 %v257
    %1582 = vmatpush1.msra.mxu0 %v256
    %1583 = vmatprep.subr.mxu0 %v260
    %1584 = vmatpush1.msra.mxu0 %v259
    %1585 = vmatprep.subr.mxu0 %v263
    %1586 = vmatpush1.msra.mxu0 %v262
    %1587 = vmatprep.subr.mxu0 %v266
    %1588 = vmatpush1.msra.mxu0 %v265
    %1589 = vmatprep.subr.mxu0 %v269
    %1590 = vmatpush1.msra.mxu0 %v268
    %1591 = vmatprep.subr.mxu0 %v272
    %1592 = vmatpush1.msra.mxu0 %v271
    %1593 = vmatprep.subr.mxu0 %v275
    %1594 = vmatpush1.msra.mxu0 %v274
    %1595 = vmatprep.subr.mxu0 %v278
    %1596 = vmatpush1.msra.mxu0 %v277
    %1597 = vmatprep.subr.mxu0 0.0
    %1598 = vmatpush1.msra.mxu0 0.0
    %1599 = vmatprep.subr.mxu0 0.0
    %1600 = vmatpush1.msra.mxu0 0.0
    %1601 = vmatprep.subr.mxu0 0.0
    %1602 = vmatpush1.msra.mxu0 0.0
    %1603 = vmatprep.subr.mxu0 0.0
    %1604 = vmatpush1.msra.mxu0 0.0
    %1605 = vmatprep.subr.mxu0 0.0
    %1606 = vmatpush1.msra.mxu0 0.0
    %1607 = vmatprep.subr.mxu0 0.0
    %1608 = vmatpush1.msra.mxu0 0.0
    %1609 = vmatprep.subr.mxu0 0.0
    %1610 = vmatpush1.msra.mxu0 0.0
    %1611 = vmatprep.subr.mxu0 0.0
    %1612 = vmatpush1.msra.mxu0 0.0
    %1613 = vmatprep.subr.mxu0 0.0
    %1614 = vmatpush1.msra.mxu0 0.0
    %1615 = vmatprep.subr.mxu0 0.0
    %1616 = vmatpush1.msra.mxu0 0.0
    %1617 = vmatprep.subr.mxu0 0.0
    %1618 = vmatpush1.msra.mxu0 0.0
    %1619 = vmatprep.subr.mxu0 0.0
    %1620 = vmatpush1.msra.mxu0 0.0
    %1621 = vmatprep.subr.mxu0 0.0
    %1622 = vmatpush1.msra.mxu0 0.0
    %1623 = vmatprep.subr.mxu0 0.0
    %1624 = vmatpush1.msra.mxu0 0.0
    %1625 = vmatprep.subr.mxu0 0.0
    %1626 = vmatpush1.msra.mxu0 0.0
    %1627 = vmatprep.subr.mxu0 0.0
    %1628 = vmatpush1.msra.mxu0 0.0
    %1629 = vmatprep.mubr.f32.mxu0 0.0
    %1630 = vmatmul.mubr.f32.gmra.mrb[0].mxu0 %v1562
    %v1631 = vpop.f32.mrb[0].mxu0
    %v1632 = vadd.f32 %v286, %v1631
    %v1633 = vpop.f32.mrb[0].mxu0
    %v1634 = vadd.f32 %v290, %v1633
    %1635 = vdwg.mxu0
    %1636 = vmatprep.subr.mxu0 0.0
    %1637 = vmatpush1.msra.mxu0 %v234
    %1638 = vmatprep.subr.mxu0 0.0
    %1639 = vmatpush1.msra.mxu0 %v237
    %1640 = vmatprep.subr.mxu0 0.0
    %1641 = vmatpush1.msra.mxu0 %v240
    %1642 = vmatprep.subr.mxu0 0.0
    %1643 = vmatpush1.msra.mxu0 %v243
    %1644 = vmatprep.subr.mxu0 0.0
    %1645 = vmatpush1.msra.mxu0 %v246
    %1646 = vmatprep.subr.mxu0 0.0
    %1647 = vmatpush1.msra.mxu0 %v249
    %1648 = vmatprep.subr.mxu0 0.0
    %1649 = vmatpush1.msra.mxu0 %v252
    %1650 = vmatprep.subr.mxu0 0.0
    %1651 = vmatpush1.msra.mxu0 %v255
    %1652 = vmatprep.subr.mxu0 0.0
    %1653 = vmatpush1.msra.mxu0 %v258
    %1654 = vmatprep.subr.mxu0 0.0
    %1655 = vmatpush1.msra.mxu0 %v261
    %1656 = vmatprep.subr.mxu0 0.0
    %1657 = vmatpush1.msra.mxu0 %v264
    %1658 = vmatprep.subr.mxu0 0.0
    %1659 = vmatpush1.msra.mxu0 %v267
    %1660 = vmatprep.subr.mxu0 0.0
    %1661 = vmatpush1.msra.mxu0 %v270
    %1662 = vmatprep.subr.mxu0 0.0
    %1663 = vmatpush1.msra.mxu0 %v273
    %1664 = vmatprep.subr.mxu0 0.0
    %1665 = vmatpush1.msra.mxu0 %v276
    %1666 = vmatprep.subr.mxu0 0.0
    %1667 = vmatpush1.msra.mxu0 %v279
    %1668 = vmatprep.subr.mxu0 0.0
    %1669 = vmatpush1.msra.mxu0 0.0
    %1670 = vmatprep.subr.mxu0 0.0
    %1671 = vmatpush1.msra.mxu0 0.0
    %1672 = vmatprep.subr.mxu0 0.0
    %1673 = vmatpush1.msra.mxu0 0.0
    %1674 = vmatprep.subr.mxu0 0.0
    %1675 = vmatpush1.msra.mxu0 0.0
    %1676 = vmatprep.subr.mxu0 0.0
    %1677 = vmatpush1.msra.mxu0 0.0
    %1678 = vmatprep.subr.mxu0 0.0
    %1679 = vmatpush1.msra.mxu0 0.0
    %1680 = vmatprep.subr.mxu0 0.0
    %1681 = vmatpush1.msra.mxu0 0.0
    %1682 = vmatprep.subr.mxu0 0.0
    %1683 = vmatpush1.msra.mxu0 0.0
    %1684 = vmatprep.subr.mxu0 0.0
    %1685 = vmatpush1.msra.mxu0 0.0
    %1686 = vmatprep.subr.mxu0 0.0
    %1687 = vmatpush1.msra.mxu0 0.0
    %1688 = vmatprep.subr.mxu0 0.0
    %1689 = vmatpush1.msra.mxu0 0.0
    %1690 = vmatprep.subr.mxu0 0.0
    %1691 = vmatpush1.msra.mxu0 0.0
    %1692 = vmatprep.subr.mxu0 0.0
    %1693 = vmatpush1.msra.mxu0 0.0
    %1694 = vmatprep.subr.mxu0 0.0
    %1695 = vmatpush1.msra.mxu0 0.0
    %1696 = vmatprep.subr.mxu0 0.0
    %1697 = vmatpush1.msra.mxu0 0.0
    %1698 = vmatprep.subr.mxu0 0.0
    %1699 = vmatpush1.msra.mxu0 0.0
    %1700 = vmatprep.mubr.f32.mxu0 0.0
    %1701 = vmatmul.mubr.f32.gmra.mrb[0].mxu0 %v1562
    %v1702 = vpop.f32.mrb[0].mxu0
    %v1703 = vadd.f32 %v294, %v1702
    %v1704 = vpop.f32.mrb[0].mxu0
    %1705 = vdwg.mxu0
    %v1708 = vcombine.low %v1632, %v1634
    %v1710 = vunpack.c.l.s4 1966171168
    %v1711 = vunpack.c.0.s8 %v1710
    %v1712 = vlaneseq
    %v1713 = vshrl.u32 %v1712, 7
    %v1714 = vsub.s32 %v1711, %v1713
    %v1715 = vrot.slane %v1708, %v1714
    %v1717 = vunpack.c.l.s4 1966171168
    %v1718 = vunpack.c.0.s8 %v1717
    %v1719 = vlaneseq
    %v1720 = vshrl.u32 %v1719, 7
    %v1721 = vsub.s32 %v1718, %v1720
    %v1722 = vrot.slane %v1715, %v1721
    %v1724 = vadd.f32 %v1564, %v1722
    %v1725 = vxor.u32 %v1724, 2147483648
    %v1726 = vmul.f32 %v1725, 1.442695
    %v1727 = vpow.pop %v1726
    %v1728 = vadd.f32 %v1727, 1.0
    %v1729 = vrcp.pop %v1728
    %v1730 = vmul.f32 1.0, %v1729
    %v1731 = vmul.f32 %v1730, %v1703
    %v1733 = vrot.slane %v1564, 2
    %v1735 = vadd.f32 %v1733, %v1731
    %v1736 = vtanh.pop %v1735
    %v1738 = vrot.slane %v1730, 1
    %v1740 = vsub.f32 1.0, %v1738
    %v1741 = vmul.f32 %v1740, %v1736
    %v1742 = vmul.f32 %v1738, %v1562
    %v1743 = vadd.f32 %v1741, %v1742
    %vm1744 = vcmask 253952
    %1745 = vst.msk [vmem:[#allocation9] sm:$0x1] %vm1744, %v1743
    // Predicated region
    $region34: #{tpu_custom_call.1} parent=1 // pred_check
      _
    $region35: #{tpu_custom_call.1} parent=1 // pred_check_branch
      %1747 = sbr.rel (0) target = $region37
    $region36: #{tpu_custom_call.1} parent=1 // pred_region
      %s1749 = ssub.s32 16, 16
      %1750 = vsyncadd [#allocation5], %s1749
      %s1752 = sshll.u32 [#allocation9], 4
      %s1753 = int_to_ptr.vmem [resolvable:$true] %s1752
      %1755 = dma.vmem_to_hbm [thread:$0]  %s1753, 16, %s5, [#allocation5]
    $region37: #{tpu_custom_call.1} parent=1 // pred_fallthru
      _
    // Predicated region
    $region38: #{tpu_custom_call.1} parent=1 // pred_check
      _
    $region39: #{tpu_custom_call.1} parent=1 // pred_check_branch
      %1757 = sbr.rel (0) target = $region41
    $region40: #{tpu_custom_call.1} parent=1 // pred_region
      %1758 = dma.done [#allocation5], 16
    $region41: #{tpu_custom_call.1} parent=1 // pred_fallthru
      _
    %1759 = vsyncpa [#allocation4], 1
    %1760 = vsyncpa [#allocation7], 1
    %1761 = vsyncpa [#allocation5], 1

</llo_original>
